<compile_context>
chip_gen: v7x
topology: tpu7x:2x2x1
jax: 0.10.0
libtpu: 0.0.40
codegen_flags: <defaults>
</compile_context>

<pallas_src>
import functools

import jax
import jax.numpy as jnp
from jax.experimental import pallas as pl
from jax.experimental.pallas import tpu as pltpu


def _lstm_fc_kernel(x_ref, w0_ref, b0_ref, w1_ref, b1_ref,
                    fc_w_ref, fc_b_ref, o_ref, *, hidden_size, matmul_dtype):
    """x_ref: (B, T, F); w0_ref: (F+H, 4H); w1_ref: (2H, 4H); o_ref: (B, 5)."""
    H = hidden_size
    B, T, _ = x_ref.shape

    w0 = w0_ref[...]                                   # (F+H, 4H) matmul_dtype
    w1 = w1_ref[...]                                   # (2H, 4H)  matmul_dtype

    # Hoist bias broadcasts out of the (unrolled) loop.
    b0 = jnp.broadcast_to(b0_ref[...], (B, 4 * H))     # f32
    b1 = jnp.broadcast_to(b1_ref[...], (B, 4 * H))     # f32

    # Whole input sequence is tiny (~0.5 KB): load once, slice statically.
    x_all = x_ref[...].astype(matmul_dtype)            # (B, T, F)

    def cell(inp, c, w, b):
        # One fused MXU op per cell; accumulate in f32.
        gates = jnp.dot(inp, w, preferred_element_type=jnp.float32) + b  # (B, 4H)
        # Two full-vreg EUP passes instead of four 32-lane-slice transcendentals.
        sig = jax.nn.sigmoid(gates)
        th = jnp.tanh(gates)
        i_g = sig[:, 0 * H:1 * H]
        f_g = sig[:, 1 * H:2 * H]
        g_g = th[:, 2 * H:3 * H]
        o_g = sig[:, 3 * H:4 * H]
        c_new = f_g * c + i_g * g_g
        h_new = o_g * jnp.tanh(c_new)
        return h_new, c_new

    zeros = jnp.zeros((B, H), dtype=jnp.float32)
    h0, c0, h1, c1 = zeros, zeros, zeros, zeros

    # Fully unrolled recurrence (T is static and small): keeps the serial
    # dependency chain visible to the scheduler and makes x slicing static.
    for t in range(T):
        x_t = x_all[:, t, :]                                        # (B, F)
        in0 = jnp.concatenate([x_t, h0.astype(matmul_dtype)], axis=-1)   # (B, F+H)
        h0, c0 = cell(in0, c0, w0, b0)                              # layer 0
        in1 = jnp.concatenate([h0, h1], axis=-1).astype(matmul_dtype)    # (B, 2H)
        h1, c1 = cell(in1, c1, w1, b1)                              # layer 1

    # fc: (B, H) @ (H, 5) + (1, 5); off the recurrent chain, keep f32.
    out = jnp.dot(h1, fc_w_ref[...],
                  preferred_element_type=jnp.float32) + fc_b_ref[...]
    o_ref[...] = out.astype(o_ref.dtype)


def bitcoin_lstm_forward(x_btf, params, hidden_size, *, matmul_dtype=jnp.float32):
    """x_btf: (B, T, F) float32 -> (B, 5) float32."""
    B, T, F = x_btf.shape
    H = hidden_size

    # Fuse input/hidden weights along the contraction dim; pre-sum biases.
    w0_cat = jnp.concatenate(
        [params["weight_ih_l0"].T, params["weight_hh_l0"].T], axis=0
    ).astype(matmul_dtype)                                  # (F+H, 4H)
    w1_cat = jnp.concatenate(
        [params["weight_ih_l1"].T, params["weight_hh_l1"].T], axis=0
    ).astype(matmul_dtype)                                  # (2H, 4H)
    b0 = (params["bias_ih_l0"] + params["bias_hh_l0"]).reshape(1, 4 * H)
    b1 = (params["bias_ih_l1"] + params["bias_hh_l1"]).reshape(1, 4 * H)
    fc_w = params["fc_weight"].T                            # (H, 5) f32
    fc_b = params["fc_bias"].reshape(1, 5)                  # (1, 5) f32

    vmem = functools.partial(pl.BlockSpec, memory_space=pltpu.MemorySpace.VMEM)
    kernel = functools.partial(_lstm_fc_kernel, hidden_size=H,
                               matmul_dtype=matmul_dtype)

    # Single invocation, whole arrays resident in VMEM (no grid: ~70 KB total).
    return pl.pallas_call(
        kernel,
        out_shape=jax.ShapeDtypeStruct((B, 5), jnp.float32),
        in_specs=[vmem()] * 7,
        out_specs=vmem(),
    )(x_btf, w0_cat, b0, w1_cat, b1, fc_w, fc_b)


def make_params(key, input_size, hidden_size):
    """Deterministic init mimicking PyTorch LSTM/Linear uniform(-1/sqrt(H), 1/sqrt(H))."""
    H = hidden_size
    bound = 1.0 / (H ** 0.5)
    names_shapes = [
        ("weight_ih_l0", (4 * H, input_size)),
        ("weight_hh_l0", (4 * H, H)),
        ("bias_ih_l0", (4 * H,)),
        ("bias_hh_l0", (4 * H,)),
        ("weight_ih_l1", (4 * H, H)),
        ("weight_hh_l1", (4 * H, H)),
        ("bias_ih_l1", (4 * H,)),
        ("bias_hh_l1", (4 * H,)),
        ("fc_weight", (5, H)),
        ("fc_bias", (5,)),
    ]
    params = {}
    keys = jax.random.split(key, len(names_shapes))
    for k, (name, shape) in zip(keys, names_shapes):
        params[name] = jax.random.uniform(
            k, shape, dtype=jnp.float32, minval=-bound, maxval=bound)
    return params


def reference_forward(x_btf, params, hidden_size):
    """Pure-JAX f32 reference of the PyTorch forward (eval mode)."""
    H = hidden_size
    B, T, F = x_btf.shape

    def cell(x_t, h, c, w_ih, w_hh, b_ih, b_hh):
        gates = x_t @ w_ih.T + b_ih + h @ w_hh.T + b_hh
        i_g = jax.nn.sigmoid(gates[:, 0 * H:1 * H])
        f_g = jax.nn.sigmoid(gates[:, 1 * H:2 * H])
        g_g = jnp.tanh(gates[:, 2 * H:3 * H])
        o_g = jax.nn.sigmoid(gates[:, 3 * H:4 * H])
        c_new = f_g * c + i_g * g_g
        return o_g * jnp.tanh(c_new), c_new

    h0 = c0 = h1 = c1 = jnp.zeros((B, H), jnp.float32)
    for t in range(T):
        x_t = x_btf[:, t, :]
        h0, c0 = cell(x_t, h0, c0, params["weight_ih_l0"], params["weight_hh_l0"],
                      params["bias_ih_l0"], params["bias_hh_l0"])
        h1, c1 = cell(h0, h1, c1, params["weight_ih_l1"], params["weight_hh_l1"],
                      params["bias_ih_l1"], params["bias_hh_l1"])
    return h1 @ params["fc_weight"].T + params["fc_bias"]


if __name__ == "__main__":
    B, T, F, H = 2, 8, 8, 32  # batch, seq_len, input_size, hidden_size

    key = jax.random.PRNGKey(0)
    kx, kp = jax.random.split(key)
    x = jax.random.normal(kx, (B, T, F), dtype=jnp.float32)
    params = make_params(kp, F, H)

    ref = reference_forward(x, params, H)

    # Default f32 path (safe on v5e; exact match to reference).
    out_f32 = jax.block_until_ready(bitcoin_lstm_forward(x, params, H))
    assert out_f32.shape == (B, 5)
    assert jnp.allclose(out_f32, ref, atol=1e-4, rtol=1e-4), (out_f32, ref)

    # bf16 MXU-operand fast path (v6e/v7x): single-pass vmatmuls, f32 state.
    out_bf16 = jax.block_until_ready(
        bitcoin_lstm_forward(x, params, H, matmul_dtype=jnp.bfloat16))
    assert out_bf16.shape == (B, 5)
    assert jnp.allclose(out_bf16, ref, atol=1e-1, rtol=1e-1), (out_bf16, ref)

    print("KERNEL_OK")
</pallas_src>

<mosaic_0001>
module attributes {stable_mosaic.version = 11 : i64} {
  func.func @_lstm_fc_kernel(%arg0: memref<2x8x8xf32, #tpu.memory_space<vmem>>, %arg1: memref<40x128xf32, #tpu.memory_space<vmem>>, %arg2: memref<1x128xf32, #tpu.memory_space<vmem>>, %arg3: memref<64x128xf32, #tpu.memory_space<vmem>>, %arg4: memref<1x128xf32, #tpu.memory_space<vmem>>, %arg5: memref<32x5xf32, #tpu.memory_space<vmem>>, %arg6: memref<1x5xf32, #tpu.memory_space<vmem>>, %arg7: memref<2x5xf32, #tpu.memory_space<vmem>>) attributes {dimension_semantics = [], scalar_prefetch = 0 : i64, scratch_operands = 0 : i64, tpu.core_type = #tpu.core_type<tc>} {
    %c0 = arith.constant 0 : index
    %c0_0 = arith.constant 0 : index
    %0 = vector.load %arg1[%c0, %c0_0] : memref<40x128xf32, #tpu.memory_space<vmem>>, vector<40x128xf32>
    %c0_1 = arith.constant 0 : index
    %c0_2 = arith.constant 0 : index
    %1 = vector.load %arg3[%c0_1, %c0_2] : memref<64x128xf32, #tpu.memory_space<vmem>>, vector<64x128xf32>
    %c0_3 = arith.constant 0 : index
    %c0_4 = arith.constant 0 : index
    %2 = vector.load %arg2[%c0_3, %c0_4] : memref<1x128xf32, #tpu.memory_space<vmem>>, vector<1x128xf32>
    %3 = vector.shape_cast %2 : vector<1x128xf32> to vector<1x128xf32>
    %4 = vector.broadcast %3 : vector<1x128xf32> to vector<2x128xf32>
    %c0_5 = arith.constant 0 : index
    %c0_6 = arith.constant 0 : index
    %5 = vector.load %arg4[%c0_5, %c0_6] : memref<1x128xf32, #tpu.memory_space<vmem>>, vector<1x128xf32>
    %6 = vector.shape_cast %5 : vector<1x128xf32> to vector<1x128xf32>
    %7 = vector.broadcast %6 : vector<1x128xf32> to vector<2x128xf32>
    %c0_7 = arith.constant 0 : index
    %c0_8 = arith.constant 0 : index
    %c0_9 = arith.constant 0 : index
    %8 = vector.load %arg0[%c0_7, %c0_8, %c0_9] : memref<2x8x8xf32, #tpu.memory_space<vmem>>, vector<2x8x8xf32>
    %cst = arith.constant 0.000000e+00 : f32
    %9 = vector.broadcast %cst : f32 to vector<2x32xf32>
    %10 = vector.extract_strided_slice %8 {offsets = [0, 0, 0], sizes = [2, 1, 8], strides = [1, 1, 1]} : vector<2x8x8xf32> to vector<2x1x8xf32>
    %11 = vector.shape_cast %10 : vector<2x1x8xf32> to vector<2x8xf32>
    %12 = tpu.concatenate %11, %9 in 1 : vector<2x8xf32>, vector<2x32xf32> -> vector<2x40xf32>
    %cst_10 = arith.constant dense<0.000000e+00> : vector<2x128xf32>
    %13 = tpu.matmul %12, %0, %cst_10 {dimension_numbers = #tpu.dot_dimension_numbers<[1], [0], [0], [1], [0, 0, 1, 1], [], []>} : vector<2x40xf32>, vector<40x128xf32>, vector<2x128xf32> -> vector<2x128xf32>
    %14 = arith.addf %13, %4 : vector<2x128xf32>
    %15 = arith.negf %14 : vector<2x128xf32>
    %16 = math.exp %15 : vector<2x128xf32>
    %cst_11 = arith.constant 1.000000e+00 : f32
    %17 = vector.broadcast %cst_11 : f32 to vector<2x128xf32>
    %18 = arith.addf %17, %16 : vector<2x128xf32>
    %19 = arith.divf %17, %18 : vector<2x128xf32>
    %20 = math.tanh %14 : vector<2x128xf32>
    %21 = vector.extract_strided_slice %19 {offsets = [0, 0], sizes = [2, 32], strides = [1, 1]} : vector<2x128xf32> to vector<2x32xf32>
    %22 = vector.extract_strided_slice %19 {offsets = [0, 32], sizes = [2, 32], strides = [1, 1]} : vector<2x128xf32> to vector<2x32xf32>
    %23 = vector.extract_strided_slice %20 {offsets = [0, 64], sizes = [2, 32], strides = [1, 1]} : vector<2x128xf32> to vector<2x32xf32>
    %24 = vector.extract_strided_slice %19 {offsets = [0, 96], sizes = [2, 32], strides = [1, 1]} : vector<2x128xf32> to vector<2x32xf32>
    %25 = arith.mulf %22, %9 : vector<2x32xf32>
    %26 = arith.mulf %21, %23 : vector<2x32xf32>
    %27 = arith.addf %25, %26 : vector<2x32xf32>
    %28 = math.tanh %27 : vector<2x32xf32>
    %29 = arith.mulf %24, %28 : vector<2x32xf32>
    %30 = tpu.concatenate %29, %9 in 1 : vector<2x32xf32>, vector<2x32xf32> -> vector<2x64xf32>
    %cst_12 = arith.constant dense<0.000000e+00> : vector<2x128xf32>
    %31 = tpu.matmul %30, %1, %cst_12 {dimension_numbers = #tpu.dot_dimension_numbers<[1], [0], [0], [1], [0, 0, 1, 1], [], []>} : vector<2x64xf32>, vector<64x128xf32>, vector<2x128xf32> -> vector<2x128xf32>
    %32 = arith.addf %31, %7 : vector<2x128xf32>
    %33 = arith.negf %32 : vector<2x128xf32>
    %34 = math.exp %33 : vector<2x128xf32>
    %cst_13 = arith.constant 1.000000e+00 : f32
    %35 = vector.broadcast %cst_13 : f32 to vector<2x128xf32>
    %36 = arith.addf %35, %34 : vector<2x128xf32>
    %37 = arith.divf %35, %36 : vector<2x128xf32>
    %38 = math.tanh %32 : vector<2x128xf32>
    %39 = vector.extract_strided_slice %37 {offsets = [0, 0], sizes = [2, 32], strides = [1, 1]} : vector<2x128xf32> to vector<2x32xf32>
    %40 = vector.extract_strided_slice %37 {offsets = [0, 32], sizes = [2, 32], strides = [1, 1]} : vector<2x128xf32> to vector<2x32xf32>
    %41 = vector.extract_strided_slice %38 {offsets = [0, 64], sizes = [2, 32], strides = [1, 1]} : vector<2x128xf32> to vector<2x32xf32>
    %42 = vector.extract_strided_slice %37 {offsets = [0, 96], sizes = [2, 32], strides = [1, 1]} : vector<2x128xf32> to vector<2x32xf32>
    %43 = arith.mulf %40, %9 : vector<2x32xf32>
    %44 = arith.mulf %39, %41 : vector<2x32xf32>
    %45 = arith.addf %43, %44 : vector<2x32xf32>
    %46 = math.tanh %45 : vector<2x32xf32>
    %47 = arith.mulf %42, %46 : vector<2x32xf32>
    %48 = vector.extract_strided_slice %8 {offsets = [0, 1, 0], sizes = [2, 1, 8], strides = [1, 1, 1]} : vector<2x8x8xf32> to vector<2x1x8xf32>
    %49 = vector.shape_cast %48 : vector<2x1x8xf32> to vector<2x8xf32>
    %50 = tpu.concatenate %49, %29 in 1 : vector<2x8xf32>, vector<2x32xf32> -> vector<2x40xf32>
    %cst_14 = arith.constant dense<0.000000e+00> : vector<2x128xf32>
    %51 = tpu.matmul %50, %0, %cst_14 {dimension_numbers = #tpu.dot_dimension_numbers<[1], [0], [0], [1], [0, 0, 1, 1], [], []>} : vector<2x40xf32>, vector<40x128xf32>, vector<2x128xf32> -> vector<2x128xf32>
    %52 = arith.addf %51, %4 : vector<2x128xf32>
    %53 = arith.negf %52 : vector<2x128xf32>
    %54 = math.exp %53 : vector<2x128xf32>
    %cst_15 = arith.constant 1.000000e+00 : f32
    %55 = vector.broadcast %cst_15 : f32 to vector<2x128xf32>
    %56 = arith.addf %55, %54 : vector<2x128xf32>
    %57 = arith.divf %55, %56 : vector<2x128xf32>
    %58 = math.tanh %52 : vector<2x128xf32>
    %59 = vector.extract_strided_slice %57 {offsets = [0, 0], sizes = [2, 32], strides = [1, 1]} : vector<2x128xf32> to vector<2x32xf32>
    %60 = vector.extract_strided_slice %57 {offsets = [0, 32], sizes = [2, 32], strides = [1, 1]} : vector<2x128xf32> to vector<2x32xf32>
    %61 = vector.extract_strided_slice %58 {offsets = [0, 64], sizes = [2, 32], strides = [1, 1]} : vector<2x128xf32> to vector<2x32xf32>
    %62 = vector.extract_strided_slice %57 {offsets = [0, 96], sizes = [2, 32], strides = [1, 1]} : vector<2x128xf32> to vector<2x32xf32>
    %63 = arith.mulf %60, %27 : vector<2x32xf32>
    %64 = arith.mulf %59, %61 : vector<2x32xf32>
    %65 = arith.addf %63, %64 : vector<2x32xf32>
    %66 = math.tanh %65 : vector<2x32xf32>
    %67 = arith.mulf %62, %66 : vector<2x32xf32>
    %68 = tpu.concatenate %67, %47 in 1 : vector<2x32xf32>, vector<2x32xf32> -> vector<2x64xf32>
    %cst_16 = arith.constant dense<0.000000e+00> : vector<2x128xf32>
    %69 = tpu.matmul %68, %1, %cst_16 {dimension_numbers = #tpu.dot_dimension_numbers<[1], [0], [0], [1], [0, 0, 1, 1], [], []>} : vector<2x64xf32>, vector<64x128xf32>, vector<2x128xf32> -> vector<2x128xf32>
    %70 = arith.addf %69, %7 : vector<2x128xf32>
    %71 = arith.negf %70 : vector<2x128xf32>
    %72 = math.exp %71 : vector<2x128xf32>
    %cst_17 = arith.constant 1.000000e+00 : f32
    %73 = vector.broadcast %cst_17 : f32 to vector<2x128xf32>
    %74 = arith.addf %73, %72 : vector<2x128xf32>
    %75 = arith.divf %73, %74 : vector<2x128xf32>
    %76 = math.tanh %70 : vector<2x128xf32>
    %77 = vector.extract_strided_slice %75 {offsets = [0, 0], sizes = [2, 32], strides = [1, 1]} : vector<2x128xf32> to vector<2x32xf32>
    %78 = vector.extract_strided_slice %75 {offsets = [0, 32], sizes = [2, 32], strides = [1, 1]} : vector<2x128xf32> to vector<2x32xf32>
    %79 = vector.extract_strided_slice %76 {offsets = [0, 64], sizes = [2, 32], strides = [1, 1]} : vector<2x128xf32> to vector<2x32xf32>
    %80 = vector.extract_strided_slice %75 {offsets = [0, 96], sizes = [2, 32], strides = [1, 1]} : vector<2x128xf32> to vector<2x32xf32>
    %81 = arith.mulf %78, %45 : vector<2x32xf32>
    %82 = arith.mulf %77, %79 : vector<2x32xf32>
    %83 = arith.addf %81, %82 : vector<2x32xf32>
    %84 = math.tanh %83 : vector<2x32xf32>
    %85 = arith.mulf %80, %84 : vector<2x32xf32>
    %86 = vector.extract_strided_slice %8 {offsets = [0, 2, 0], sizes = [2, 1, 8], strides = [1, 1, 1]} : vector<2x8x8xf32> to vector<2x1x8xf32>
    %87 = vector.shape_cast %86 : vector<2x1x8xf32> to vector<2x8xf32>
    %88 = tpu.concatenate %87, %67 in 1 : vector<2x8xf32>, vector<2x32xf32> -> vector<2x40xf32>
    %cst_18 = arith.constant dense<0.000000e+00> : vector<2x128xf32>
    %89 = tpu.matmul %88, %0, %cst_18 {dimension_numbers = #tpu.dot_dimension_numbers<[1], [0], [0], [1], [0, 0, 1, 1], [], []>} : vector<2x40xf32>, vector<40x128xf32>, vector<2x128xf32> -> vector<2x128xf32>
    %90 = arith.addf %89, %4 : vector<2x128xf32>
    %91 = arith.negf %90 : vector<2x128xf32>
    %92 = math.exp %91 : vector<2x128xf32>
    %cst_19 = arith.constant 1.000000e+00 : f32
    %93 = vector.broadcast %cst_19 : f32 to vector<2x128xf32>
    %94 = arith.addf %93, %92 : vector<2x128xf32>
    %95 = arith.divf %93, %94 : vector<2x128xf32>
    %96 = math.tanh %90 : vector<2x128xf32>
    %97 = vector.extract_strided_slice %95 {offsets = [0, 0], sizes = [2, 32], strides = [1, 1]} : vector<2x128xf32> to vector<2x32xf32>
    %98 = vector.extract_strided_slice %95 {offsets = [0, 32], sizes = [2, 32], strides = [1, 1]} : vector<2x128xf32> to vector<2x32xf32>
    %99 = vector.extract_strided_slice %96 {offsets = [0, 64], sizes = [2, 32], strides = [1, 1]} : vector<2x128xf32> to vector<2x32xf32>
    %100 = vector.extract_strided_slice %95 {offsets = [0, 96], sizes = [2, 32], strides = [1, 1]} : vector<2x128xf32> to vector<2x32xf32>
    %101 = arith.mulf %98, %65 : vector<2x32xf32>
    %102 = arith.mulf %97, %99 : vector<2x32xf32>
    %103 = arith.addf %101, %102 : vector<2x32xf32>
    %104 = math.tanh %103 : vector<2x32xf32>
    %105 = arith.mulf %100, %104 : vector<2x32xf32>
    %106 = tpu.concatenate %105, %85 in 1 : vector<2x32xf32>, vector<2x32xf32> -> vector<2x64xf32>
    %cst_20 = arith.constant dense<0.000000e+00> : vector<2x128xf32>
    %107 = tpu.matmul %106, %1, %cst_20 {dimension_numbers = #tpu.dot_dimension_numbers<[1], [0], [0], [1], [0, 0, 1, 1], [], []>} : vector<2x64xf32>, vector<64x128xf32>, vector<2x128xf32> -> vector<2x128xf32>
    %108 = arith.addf %107, %7 : vector<2x128xf32>
    %109 = arith.negf %108 : vector<2x128xf32>
    %110 = math.exp %109 : vector<2x128xf32>
    %cst_21 = arith.constant 1.000000e+00 : f32
    %111 = vector.broadcast %cst_21 : f32 to vector<2x128xf32>
    %112 = arith.addf %111, %110 : vector<2x128xf32>
    %113 = arith.divf %111, %112 : vector<2x128xf32>
    %114 = math.tanh %108 : vector<2x128xf32>
    %115 = vector.extract_strided_slice %113 {offsets = [0, 0], sizes = [2, 32], strides = [1, 1]} : vector<2x128xf32> to vector<2x32xf32>
    %116 = vector.extract_strided_slice %113 {offsets = [0, 32], sizes = [2, 32], strides = [1, 1]} : vector<2x128xf32> to vector<2x32xf32>
    %117 = vector.extract_strided_slice %114 {offsets = [0, 64], sizes = [2, 32], strides = [1, 1]} : vector<2x128xf32> to vector<2x32xf32>
    %118 = vector.extract_strided_slice %113 {offsets = [0, 96], sizes = [2, 32], strides = [1, 1]} : vector<2x128xf32> to vector<2x32xf32>
    %119 = arith.mulf %116, %83 : vector<2x32xf32>
    %120 = arith.mulf %115, %117 : vector<2x32xf32>
    %121 = arith.addf %119, %120 : vector<2x32xf32>
    %122 = math.tanh %121 : vector<2x32xf32>
    %123 = arith.mulf %118, %122 : vector<2x32xf32>
    %124 = vector.extract_strided_slice %8 {offsets = [0, 3, 0], sizes = [2, 1, 8], strides = [1, 1, 1]} : vector<2x8x8xf32> to vector<2x1x8xf32>
    %125 = vector.shape_cast %124 : vector<2x1x8xf32> to vector<2x8xf32>
    %126 = tpu.concatenate %125, %105 in 1 : vector<2x8xf32>, vector<2x32xf32> -> vector<2x40xf32>
    %cst_22 = arith.constant dense<0.000000e+00> : vector<2x128xf32>
    %127 = tpu.matmul %126, %0, %cst_22 {dimension_numbers = #tpu.dot_dimension_numbers<[1], [0], [0], [1], [0, 0, 1, 1], [], []>} : vector<2x40xf32>, vector<40x128xf32>, vector<2x128xf32> -> vector<2x128xf32>
    %128 = arith.addf %127, %4 : vector<2x128xf32>
    %129 = arith.negf %128 : vector<2x128xf32>
    %130 = math.exp %129 : vector<2x128xf32>
    %cst_23 = arith.constant 1.000000e+00 : f32
    %131 = vector.broadcast %cst_23 : f32 to vector<2x128xf32>
    %132 = arith.addf %131, %130 : vector<2x128xf32>
    %133 = arith.divf %131, %132 : vector<2x128xf32>
    %134 = math.tanh %128 : vector<2x128xf32>
    %135 = vector.extract_strided_slice %133 {offsets = [0, 0], sizes = [2, 32], strides = [1, 1]} : vector<2x128xf32> to vector<2x32xf32>
    %136 = vector.extract_strided_slice %133 {offsets = [0, 32], sizes = [2, 32], strides = [1, 1]} : vector<2x128xf32> to vector<2x32xf32>
    %137 = vector.extract_strided_slice %134 {offsets = [0, 64], sizes = [2, 32], strides = [1, 1]} : vector<2x128xf32> to vector<2x32xf32>
    %138 = vector.extract_strided_slice %133 {offsets = [0, 96], sizes = [2, 32], strides = [1, 1]} : vector<2x128xf32> to vector<2x32xf32>
    %139 = arith.mulf %136, %103 : vector<2x32xf32>
    %140 = arith.mulf %135, %137 : vector<2x32xf32>
    %141 = arith.addf %139, %140 : vector<2x32xf32>
    %142 = math.tanh %141 : vector<2x32xf32>
    %143 = arith.mulf %138, %142 : vector<2x32xf32>
    %144 = tpu.concatenate %143, %123 in 1 : vector<2x32xf32>, vector<2x32xf32> -> vector<2x64xf32>
    %cst_24 = arith.constant dense<0.000000e+00> : vector<2x128xf32>
    %145 = tpu.matmul %144, %1, %cst_24 {dimension_numbers = #tpu.dot_dimension_numbers<[1], [0], [0], [1], [0, 0, 1, 1], [], []>} : vector<2x64xf32>, vector<64x128xf32>, vector<2x128xf32> -> vector<2x128xf32>
    %146 = arith.addf %145, %7 : vector<2x128xf32>
    %147 = arith.negf %146 : vector<2x128xf32>
    %148 = math.exp %147 : vector<2x128xf32>
    %cst_25 = arith.constant 1.000000e+00 : f32
    %149 = vector.broadcast %cst_25 : f32 to vector<2x128xf32>
    %150 = arith.addf %149, %148 : vector<2x128xf32>
    %151 = arith.divf %149, %150 : vector<2x128xf32>
    %152 = math.tanh %146 : vector<2x128xf32>
    %153 = vector.extract_strided_slice %151 {offsets = [0, 0], sizes = [2, 32], strides = [1, 1]} : vector<2x128xf32> to vector<2x32xf32>
    %154 = vector.extract_strided_slice %151 {offsets = [0, 32], sizes = [2, 32], strides = [1, 1]} : vector<2x128xf32> to vector<2x32xf32>
    %155 = vector.extract_strided_slice %152 {offsets = [0, 64], sizes = [2, 32], strides = [1, 1]} : vector<2x128xf32> to vector<2x32xf32>
    %156 = vector.extract_strided_slice %151 {offsets = [0, 96], sizes = [2, 32], strides = [1, 1]} : vector<2x128xf32> to vector<2x32xf32>
    %157 = arith.mulf %154, %121 : vector<2x32xf32>
    %158 = arith.mulf %153, %155 : vector<2x32xf32>
    %159 = arith.addf %157, %158 : vector<2x32xf32>
    %160 = math.tanh %159 : vector<2x32xf32>
    %161 = arith.mulf %156, %160 : vector<2x32xf32>
    %162 = vector.extract_strided_slice %8 {offsets = [0, 4, 0], sizes = [2, 1, 8], strides = [1, 1, 1]} : vector<2x8x8xf32> to vector<2x1x8xf32>
    %163 = vector.shape_cast %162 : vector<2x1x8xf32> to vector<2x8xf32>
    %164 = tpu.concatenate %163, %143 in 1 : vector<2x8xf32>, vector<2x32xf32> -> vector<2x40xf32>
    %cst_26 = arith.constant dense<0.000000e+00> : vector<2x128xf32>
    %165 = tpu.matmul %164, %0, %cst_26 {dimension_numbers = #tpu.dot_dimension_numbers<[1], [0], [0], [1], [0, 0, 1, 1], [], []>} : vector<2x40xf32>, vector<40x128xf32>, vector<2x128xf32> -> vector<2x128xf32>
    %166 = arith.addf %165, %4 : vector<2x128xf32>
    %167 = arith.negf %166 : vector<2x128xf32>
    %168 = math.exp %167 : vector<2x128xf32>
    %cst_27 = arith.constant 1.000000e+00 : f32
    %169 = vector.broadcast %cst_27 : f32 to vector<2x128xf32>
    %170 = arith.addf %169, %168 : vector<2x128xf32>
    %171 = arith.divf %169, %170 : vector<2x128xf32>
    %172 = math.tanh %166 : vector<2x128xf32>
    %173 = vector.extract_strided_slice %171 {offsets = [0, 0], sizes = [2, 32], strides = [1, 1]} : vector<2x128xf32> to vector<2x32xf32>
    %174 = vector.extract_strided_slice %171 {offsets = [0, 32], sizes = [2, 32], strides = [1, 1]} : vector<2x128xf32> to vector<2x32xf32>
    %175 = vector.extract_strided_slice %172 {offsets = [0, 64], sizes = [2, 32], strides = [1, 1]} : vector<2x128xf32> to vector<2x32xf32>
    %176 = vector.extract_strided_slice %171 {offsets = [0, 96], sizes = [2, 32], strides = [1, 1]} : vector<2x128xf32> to vector<2x32xf32>
    %177 = arith.mulf %174, %141 : vector<2x32xf32>
    %178 = arith.mulf %173, %175 : vector<2x32xf32>
    %179 = arith.addf %177, %178 : vector<2x32xf32>
    %180 = math.tanh %179 : vector<2x32xf32>
    %181 = arith.mulf %176, %180 : vector<2x32xf32>
    %182 = tpu.concatenate %181, %161 in 1 : vector<2x32xf32>, vector<2x32xf32> -> vector<2x64xf32>
    %cst_28 = arith.constant dense<0.000000e+00> : vector<2x128xf32>
    %183 = tpu.matmul %182, %1, %cst_28 {dimension_numbers = #tpu.dot_dimension_numbers<[1], [0], [0], [1], [0, 0, 1, 1], [], []>} : vector<2x64xf32>, vector<64x128xf32>, vector<2x128xf32> -> vector<2x128xf32>
    %184 = arith.addf %183, %7 : vector<2x128xf32>
    %185 = arith.negf %184 : vector<2x128xf32>
    %186 = math.exp %185 : vector<2x128xf32>
    %cst_29 = arith.constant 1.000000e+00 : f32
    %187 = vector.broadcast %cst_29 : f32 to vector<2x128xf32>
    %188 = arith.addf %187, %186 : vector<2x128xf32>
    %189 = arith.divf %187, %188 : vector<2x128xf32>
    %190 = math.tanh %184 : vector<2x128xf32>
    %191 = vector.extract_strided_slice %189 {offsets = [0, 0], sizes = [2, 32], strides = [1, 1]} : vector<2x128xf32> to vector<2x32xf32>
    %192 = vector.extract_strided_slice %189 {offsets = [0, 32], sizes = [2, 32], strides = [1, 1]} : vector<2x128xf32> to vector<2x32xf32>
    %193 = vector.extract_strided_slice %190 {offsets = [0, 64], sizes = [2, 32], strides = [1, 1]} : vector<2x128xf32> to vector<2x32xf32>
    %194 = vector.extract_strided_slice %189 {offsets = [0, 96], sizes = [2, 32], strides = [1, 1]} : vector<2x128xf32> to vector<2x32xf32>
    %195 = arith.mulf %192, %159 : vector<2x32xf32>
    %196 = arith.mulf %191, %193 : vector<2x32xf32>
    %197 = arith.addf %195, %196 : vector<2x32xf32>
    %198 = math.tanh %197 : vector<2x32xf32>
    %199 = arith.mulf %194, %198 : vector<2x32xf32>
    %200 = vector.extract_strided_slice %8 {offsets = [0, 5, 0], sizes = [2, 1, 8], strides = [1, 1, 1]} : vector<2x8x8xf32> to vector<2x1x8xf32>
    %201 = vector.shape_cast %200 : vector<2x1x8xf32> to vector<2x8xf32>
    %202 = tpu.concatenate %201, %181 in 1 : vector<2x8xf32>, vector<2x32xf32> -> vector<2x40xf32>
    %cst_30 = arith.constant dense<0.000000e+00> : vector<2x128xf32>
    %203 = tpu.matmul %202, %0, %cst_30 {dimension_numbers = #tpu.dot_dimension_numbers<[1], [0], [0], [1], [0, 0, 1, 1], [], []>} : vector<2x40xf32>, vector<40x128xf32>, vector<2x128xf32> -> vector<2x128xf32>
    %204 = arith.addf %203, %4 : vector<2x128xf32>
    %205 = arith.negf %204 : vector<2x128xf32>
    %206 = math.exp %205 : vector<2x128xf32>
    %cst_31 = arith.constant 1.000000e+00 : f32
    %207 = vector.broadcast %cst_31 : f32 to vector<2x128xf32>
    %208 = arith.addf %207, %206 : vector<2x128xf32>
    %209 = arith.divf %207, %208 : vector<2x128xf32>
    %210 = math.tanh %204 : vector<2x128xf32>
    %211 = vector.extract_strided_slice %209 {offsets = [0, 0], sizes = [2, 32], strides = [1, 1]} : vector<2x128xf32> to vector<2x32xf32>
    %212 = vector.extract_strided_slice %209 {offsets = [0, 32], sizes = [2, 32], strides = [1, 1]} : vector<2x128xf32> to vector<2x32xf32>
    %213 = vector.extract_strided_slice %210 {offsets = [0, 64], sizes = [2, 32], strides = [1, 1]} : vector<2x128xf32> to vector<2x32xf32>
    %214 = vector.extract_strided_slice %209 {offsets = [0, 96], sizes = [2, 32], strides = [1, 1]} : vector<2x128xf32> to vector<2x32xf32>
    %215 = arith.mulf %212, %179 : vector<2x32xf32>
    %216 = arith.mulf %211, %213 : vector<2x32xf32>
    %217 = arith.addf %215, %216 : vector<2x32xf32>
    %218 = math.tanh %217 : vector<2x32xf32>
    %219 = arith.mulf %214, %218 : vector<2x32xf32>
    %220 = tpu.concatenate %219, %199 in 1 : vector<2x32xf32>, vector<2x32xf32> -> vector<2x64xf32>
    %cst_32 = arith.constant dense<0.000000e+00> : vector<2x128xf32>
    %221 = tpu.matmul %220, %1, %cst_32 {dimension_numbers = #tpu.dot_dimension_numbers<[1], [0], [0], [1], [0, 0, 1, 1], [], []>} : vector<2x64xf32>, vector<64x128xf32>, vector<2x128xf32> -> vector<2x128xf32>
    %222 = arith.addf %221, %7 : vector<2x128xf32>
    %223 = arith.negf %222 : vector<2x128xf32>
    %224 = math.exp %223 : vector<2x128xf32>
    %cst_33 = arith.constant 1.000000e+00 : f32
    %225 = vector.broadcast %cst_33 : f32 to vector<2x128xf32>
    %226 = arith.addf %225, %224 : vector<2x128xf32>
    %227 = arith.divf %225, %226 : vector<2x128xf32>
    %228 = math.tanh %222 : vector<2x128xf32>
    %229 = vector.extract_strided_slice %227 {offsets = [0, 0], sizes = [2, 32], strides = [1, 1]} : vector<2x128xf32> to vector<2x32xf32>
    %230 = vector.extract_strided_slice %227 {offsets = [0, 32], sizes = [2, 32], strides = [1, 1]} : vector<2x128xf32> to vector<2x32xf32>
    %231 = vector.extract_strided_slice %228 {offsets = [0, 64], sizes = [2, 32], strides = [1, 1]} : vector<2x128xf32> to vector<2x32xf32>
    %232 = vector.extract_strided_slice %227 {offsets = [0, 96], sizes = [2, 32], strides = [1, 1]} : vector<2x128xf32> to vector<2x32xf32>
    %233 = arith.mulf %230, %197 : vector<2x32xf32>
    %234 = arith.mulf %229, %231 : vector<2x32xf32>
    %235 = arith.addf %233, %234 : vector<2x32xf32>
    %236 = math.tanh %235 : vector<2x32xf32>
    %237 = arith.mulf %232, %236 : vector<2x32xf32>
    %238 = vector.extract_strided_slice %8 {offsets = [0, 6, 0], sizes = [2, 1, 8], strides = [1, 1, 1]} : vector<2x8x8xf32> to vector<2x1x8xf32>
    %239 = vector.shape_cast %238 : vector<2x1x8xf32> to vector<2x8xf32>
    %240 = tpu.concatenate %239, %219 in 1 : vector<2x8xf32>, vector<2x32xf32> -> vector<2x40xf32>
    %cst_34 = arith.constant dense<0.000000e+00> : vector<2x128xf32>
    %241 = tpu.matmul %240, %0, %cst_34 {dimension_numbers = #tpu.dot_dimension_numbers<[1], [0], [0], [1], [0, 0, 1, 1], [], []>} : vector<2x40xf32>, vector<40x128xf32>, vector<2x128xf32> -> vector<2x128xf32>
    %242 = arith.addf %241, %4 : vector<2x128xf32>
    %243 = arith.negf %242 : vector<2x128xf32>
    %244 = math.exp %243 : vector<2x128xf32>
    %cst_35 = arith.constant 1.000000e+00 : f32
    %245 = vector.broadcast %cst_35 : f32 to vector<2x128xf32>
    %246 = arith.addf %245, %244 : vector<2x128xf32>
    %247 = arith.divf %245, %246 : vector<2x128xf32>
    %248 = math.tanh %242 : vector<2x128xf32>
    %249 = vector.extract_strided_slice %247 {offsets = [0, 0], sizes = [2, 32], strides = [1, 1]} : vector<2x128xf32> to vector<2x32xf32>
    %250 = vector.extract_strided_slice %247 {offsets = [0, 32], sizes = [2, 32], strides = [1, 1]} : vector<2x128xf32> to vector<2x32xf32>
    %251 = vector.extract_strided_slice %248 {offsets = [0, 64], sizes = [2, 32], strides = [1, 1]} : vector<2x128xf32> to vector<2x32xf32>
    %252 = vector.extract_strided_slice %247 {offsets = [0, 96], sizes = [2, 32], strides = [1, 1]} : vector<2x128xf32> to vector<2x32xf32>
    %253 = arith.mulf %250, %217 : vector<2x32xf32>
    %254 = arith.mulf %249, %251 : vector<2x32xf32>
    %255 = arith.addf %253, %254 : vector<2x32xf32>
    %256 = math.tanh %255 : vector<2x32xf32>
    %257 = arith.mulf %252, %256 : vector<2x32xf32>
    %258 = tpu.concatenate %257, %237 in 1 : vector<2x32xf32>, vector<2x32xf32> -> vector<2x64xf32>
    %cst_36 = arith.constant dense<0.000000e+00> : vector<2x128xf32>
    %259 = tpu.matmul %258, %1, %cst_36 {dimension_numbers = #tpu.dot_dimension_numbers<[1], [0], [0], [1], [0, 0, 1, 1], [], []>} : vector<2x64xf32>, vector<64x128xf32>, vector<2x128xf32> -> vector<2x128xf32>
    %260 = arith.addf %259, %7 : vector<2x128xf32>
    %261 = arith.negf %260 : vector<2x128xf32>
    %262 = math.exp %261 : vector<2x128xf32>
    %cst_37 = arith.constant 1.000000e+00 : f32
    %263 = vector.broadcast %cst_37 : f32 to vector<2x128xf32>
    %264 = arith.addf %263, %262 : vector<2x128xf32>
    %265 = arith.divf %263, %264 : vector<2x128xf32>
    %266 = math.tanh %260 : vector<2x128xf32>
    %267 = vector.extract_strided_slice %265 {offsets = [0, 0], sizes = [2, 32], strides = [1, 1]} : vector<2x128xf32> to vector<2x32xf32>
    %268 = vector.extract_strided_slice %265 {offsets = [0, 32], sizes = [2, 32], strides = [1, 1]} : vector<2x128xf32> to vector<2x32xf32>
    %269 = vector.extract_strided_slice %266 {offsets = [0, 64], sizes = [2, 32], strides = [1, 1]} : vector<2x128xf32> to vector<2x32xf32>
    %270 = vector.extract_strided_slice %265 {offsets = [0, 96], sizes = [2, 32], strides = [1, 1]} : vector<2x128xf32> to vector<2x32xf32>
    %271 = arith.mulf %268, %235 : vector<2x32xf32>
    %272 = arith.mulf %267, %269 : vector<2x32xf32>
    %273 = arith.addf %271, %272 : vector<2x32xf32>
    %274 = math.tanh %273 : vector<2x32xf32>
    %275 = arith.mulf %270, %274 : vector<2x32xf32>
    %276 = vector.extract_strided_slice %8 {offsets = [0, 7, 0], sizes = [2, 1, 8], strides = [1, 1, 1]} : vector<2x8x8xf32> to vector<2x1x8xf32>
    %277 = vector.shape_cast %276 : vector<2x1x8xf32> to vector<2x8xf32>
    %278 = tpu.concatenate %277, %257 in 1 : vector<2x8xf32>, vector<2x32xf32> -> vector<2x40xf32>
    %cst_38 = arith.constant dense<0.000000e+00> : vector<2x128xf32>
    %279 = tpu.matmul %278, %0, %cst_38 {dimension_numbers = #tpu.dot_dimension_numbers<[1], [0], [0], [1], [0, 0, 1, 1], [], []>} : vector<2x40xf32>, vector<40x128xf32>, vector<2x128xf32> -> vector<2x128xf32>
    %280 = arith.addf %279, %4 : vector<2x128xf32>
    %281 = arith.negf %280 : vector<2x128xf32>
    %282 = math.exp %281 : vector<2x128xf32>
    %cst_39 = arith.constant 1.000000e+00 : f32
    %283 = vector.broadcast %cst_39 : f32 to vector<2x128xf32>
    %284 = arith.addf %283, %282 : vector<2x128xf32>
    %285 = arith.divf %283, %284 : vector<2x128xf32>
    %286 = math.tanh %280 : vector<2x128xf32>
    %287 = vector.extract_strided_slice %285 {offsets = [0, 0], sizes = [2, 32], strides = [1, 1]} : vector<2x128xf32> to vector<2x32xf32>
    %288 = vector.extract_strided_slice %285 {offsets = [0, 32], sizes = [2, 32], strides = [1, 1]} : vector<2x128xf32> to vector<2x32xf32>
    %289 = vector.extract_strided_slice %286 {offsets = [0, 64], sizes = [2, 32], strides = [1, 1]} : vector<2x128xf32> to vector<2x32xf32>
    %290 = vector.extract_strided_slice %285 {offsets = [0, 96], sizes = [2, 32], strides = [1, 1]} : vector<2x128xf32> to vector<2x32xf32>
    %291 = arith.mulf %288, %255 : vector<2x32xf32>
    %292 = arith.mulf %287, %289 : vector<2x32xf32>
    %293 = arith.addf %291, %292 : vector<2x32xf32>
    %294 = math.tanh %293 : vector<2x32xf32>
    %295 = arith.mulf %290, %294 : vector<2x32xf32>
    %296 = tpu.concatenate %295, %275 in 1 : vector<2x32xf32>, vector<2x32xf32> -> vector<2x64xf32>
    %cst_40 = arith.constant dense<0.000000e+00> : vector<2x128xf32>
    %297 = tpu.matmul %296, %1, %cst_40 {dimension_numbers = #tpu.dot_dimension_numbers<[1], [0], [0], [1], [0, 0, 1, 1], [], []>} : vector<2x64xf32>, vector<64x128xf32>, vector<2x128xf32> -> vector<2x128xf32>
    %298 = arith.addf %297, %7 : vector<2x128xf32>
    %299 = arith.negf %298 : vector<2x128xf32>
    %300 = math.exp %299 : vector<2x128xf32>
    %cst_41 = arith.constant 1.000000e+00 : f32
    %301 = vector.broadcast %cst_41 : f32 to vector<2x128xf32>
    %302 = arith.addf %301, %300 : vector<2x128xf32>
    %303 = arith.divf %301, %302 : vector<2x128xf32>
    %304 = math.tanh %298 : vector<2x128xf32>
    %305 = vector.extract_strided_slice %303 {offsets = [0, 0], sizes = [2, 32], strides = [1, 1]} : vector<2x128xf32> to vector<2x32xf32>
    %306 = vector.extract_strided_slice %303 {offsets = [0, 32], sizes = [2, 32], strides = [1, 1]} : vector<2x128xf32> to vector<2x32xf32>
    %307 = vector.extract_strided_slice %304 {offsets = [0, 64], sizes = [2, 32], strides = [1, 1]} : vector<2x128xf32> to vector<2x32xf32>
    %308 = vector.extract_strided_slice %303 {offsets = [0, 96], sizes = [2, 32], strides = [1, 1]} : vector<2x128xf32> to vector<2x32xf32>
    %309 = arith.mulf %306, %273 : vector<2x32xf32>
    %310 = arith.mulf %305, %307 : vector<2x32xf32>
    %311 = arith.addf %309, %310 : vector<2x32xf32>
    %312 = math.tanh %311 : vector<2x32xf32>
    %313 = arith.mulf %308, %312 : vector<2x32xf32>
    %c0_42 = arith.constant 0 : index
    %c0_43 = arith.constant 0 : index
    %314 = vector.load %arg5[%c0_42, %c0_43] : memref<32x5xf32, #tpu.memory_space<vmem>>, vector<32x5xf32>
    %cst_44 = arith.constant dense<0.000000e+00> : vector<2x5xf32>
    %315 = tpu.matmul %313, %314, %cst_44 {dimension_numbers = #tpu.dot_dimension_numbers<[1], [0], [0], [1], [0, 0, 1, 1], [], []>} : vector<2x32xf32>, vector<32x5xf32>, vector<2x5xf32> -> vector<2x5xf32>
    %c0_45 = arith.constant 0 : index
    %c0_46 = arith.constant 0 : index
    %316 = vector.load %arg6[%c0_45, %c0_46] : memref<1x5xf32, #tpu.memory_space<vmem>>, vector<1x5xf32>
    %317 = vector.broadcast %316 : vector<1x5xf32> to vector<2x5xf32>
    %318 = arith.addf %315, %317 : vector<2x5xf32>
    %c0_47 = arith.constant 0 : index
    %c0_48 = arith.constant 0 : index
    %319 = vector.load %arg7[%c0_47, %c0_48] : memref<2x5xf32, #tpu.memory_space<vmem>>, vector<2x5xf32>
    tpu.vector_store %arg7[%c0_47, %c0_48], %318 {strides = array<i32>} : memref<2x5xf32, #tpu.memory_space<vmem>>, vector<2x5xf32>,
    return
  }
}

</mosaic_0001>

<llo_original>
// kernel: tpu_custom_call.1
$region0: #{tpu_custom_call.1}
  #allocation0 [shape = 'u32[]', space=smem, size = 0x4, offset = 0x4, fixed_abs, tag = 'smem constant byte address 0x4 - core index']
  #allocation1 [shape = 'u32[144,128]{1,0:T(1,128)}', space=vmem, size = 0x12000, scoped, tag = 'internal scratch']
  %s0 = inlined_call_operand.hbm [shape: f32[2,8,8], index: 0, kind: input, shape index: {}]
  %s1 = inlined_call_operand.vmem [shape: f32[40,128], index: 1, kind: input, shape index: {}]
  %s2 = inlined_call_operand.vmem [shape: f32[1,128], index: 2, kind: input, shape index: {}]
  %s3 = inlined_call_operand.hbm [shape: f32[64,128], index: 3, kind: input, shape index: {}]
  %s4 = inlined_call_operand.vmem [shape: f32[1,128], index: 4, kind: input, shape index: {}]
  %s5 = inlined_call_operand.vmem [shape: f32[32,5], index: 5, kind: input, shape index: {}]
  %s6 = inlined_call_operand.vmem [shape: f32[1,5], index: 6, kind: input, shape index: {}]
  %s7 = inlined_call_operand.hbm [shape: f32[2,5], index: 7, kind: output, shape index: {}]
  %s8 = sld [smem:[#allocation0]]
  $region46: #{tpu_custom_call.1} parent=0
    _
  %s10 = ssub.s32 1, %s8
  %s11 = scalar_select 0, %s10, %s8
  $region1: #{tpu_custom_call.1} parent=0
    #allocation2 [shape = 'u8[8192]{0}', space=vmem, size = 0x2000, scoped, tag = 'input window, operand 0, single buffered']
    #allocation3 [shape = 's32[1]{0}', space=sflag, size = 0x4, scoped, tag = 'scoped memory for tpu_custom_call.1']
    #allocation4 [shape = 's32[1]{0}', space=sflag, size = 0x4, scoped, tag = 'scoped memory for tpu_custom_call.1']
    #allocation5 [shape = 'u8[32768]{0}', space=vmem, size = 0x8000, scoped, tag = 'input window, operand 3, single buffered']
    #allocation6 [shape = 's32[1]{0}', space=sflag, size = 0x4, scoped, tag = 'scoped memory for tpu_custom_call.1']
    #allocation7 [shape = 'u8[1024]{0}', space=vmem, size = 0x400, scoped, tag = 'output window, operand 0, single buffered']
    %12 = vsyncpa [#allocation3], 0
    %13 = vsyncpa [#allocation6], 0
    %14 = vsyncpa [#allocation4], 0
    // Predicated region
    $region2: #{tpu_custom_call.1} parent=1 // pred_check
      _
    $region3: #{tpu_custom_call.1} parent=1 // pred_check_branch
      %16 = sbr.rel (0) target = $region5
    $region4: #{tpu_custom_call.1} parent=1 // pred_region
      %s18 = ssub.s32 256, 256
      %19 = vsyncadd [#allocation3], %s18
      %s20 = sshll.u32 [#allocation2], 4
      %s21 = int_to_ptr.vmem [resolvable:$true] %s20
      %26 = dma.hbm_to_vmem [thread:$0]  %s0, 256, %s21, [#allocation3], 128, 128, 8
    $region5: #{tpu_custom_call.1} parent=1 // pred_fallthru
      _
    // Predicated region
    $region6: #{tpu_custom_call.1} parent=1 // pred_check
      _
    $region7: #{tpu_custom_call.1} parent=1 // pred_check_branch
      %28 = sbr.rel (0) target = $region9
    $region8: #{tpu_custom_call.1} parent=1 // pred_region
      _
    $region9: #{tpu_custom_call.1} parent=1 // pred_fallthru
      _
    // Predicated region
    $region10: #{tpu_custom_call.1} parent=1 // pred_check
      _
    $region11: #{tpu_custom_call.1} parent=1 // pred_check_branch
      %30 = sbr.rel (0) target = $region13
    $region12: #{tpu_custom_call.1} parent=1 // pred_region
      _
    $region13: #{tpu_custom_call.1} parent=1 // pred_fallthru
      _
    // Predicated region
    $region14: #{tpu_custom_call.1} parent=1 // pred_check
      _
    $region15: #{tpu_custom_call.1} parent=1 // pred_check_branch
      %32 = sbr.rel (0) target = $region17
    $region16: #{tpu_custom_call.1} parent=1 // pred_region
      %s34 = ssub.s32 1024, 1024
      %35 = vsyncadd [#allocation6], %s34
      %s36 = sshll.u32 [#allocation5], 4
      %s37 = int_to_ptr.vmem [resolvable:$true] %s36
      %42 = dma.hbm_to_vmem [thread:$0]  %s3, 1024, %s37, [#allocation6], 128, 128, 8
    $region17: #{tpu_custom_call.1} parent=1 // pred_fallthru
      _
    // Predicated region
    $region18: #{tpu_custom_call.1} parent=1 // pred_check
      _
    $region19: #{tpu_custom_call.1} parent=1 // pred_check_branch
      %44 = sbr.rel (0) target = $region21
    $region20: #{tpu_custom_call.1} parent=1 // pred_region
      _
    $region21: #{tpu_custom_call.1} parent=1 // pred_fallthru
      _
    // Predicated region
    $region22: #{tpu_custom_call.1} parent=1 // pred_check
      _
    $region23: #{tpu_custom_call.1} parent=1 // pred_check_branch
      %46 = sbr.rel (0) target = $region25
    $region24: #{tpu_custom_call.1} parent=1 // pred_region
      _
    $region25: #{tpu_custom_call.1} parent=1 // pred_fallthru
      _
    // Predicated region
    $region26: #{tpu_custom_call.1} parent=1 // pred_check
      _
    $region27: #{tpu_custom_call.1} parent=1 // pred_check_branch
      %48 = sbr.rel (0) target = $region29
    $region28: #{tpu_custom_call.1} parent=1 // pred_region
      _
    $region29: #{tpu_custom_call.1} parent=1 // pred_fallthru
      _
    // Predicated region
    $region30: #{tpu_custom_call.1} parent=1 // pred_check
      _
    $region31: #{tpu_custom_call.1} parent=1 // pred_check_branch
      %50 = sbr.rel (0) target = $region33
    $region32: #{tpu_custom_call.1} parent=1 // pred_region
      %51 = dma.done [#allocation3], 256
    $region33: #{tpu_custom_call.1} parent=1 // pred_fallthru
      _
    // Predicated region
    $region34: #{tpu_custom_call.1} parent=1 // pred_check
      _
    $region35: #{tpu_custom_call.1} parent=1 // pred_check_branch
      %53 = sbr.rel (0) target = $region37
    $region36: #{tpu_custom_call.1} parent=1 // pred_region
      %54 = dma.done [#allocation6], 1024
    $region37: #{tpu_custom_call.1} parent=1 // pred_fallthru
      _
    %v55 = vld [vmem:[%s1] sm:$0xff]
    %v56 = vld [vmem:[%s1 + $0x8] sm:$0xff]
    %v57 = vld [vmem:[%s1 + $0x10] sm:$0xff]
    %v58 = vld [vmem:[%s1 + $0x18] sm:$0xff]
    %v59 = vld [vmem:[%s1 + $0x20] sm:$0xff]
    %v60 = vld [vmem:[#allocation5] sm:$0xff]
    %v61 = vld [vmem:[#allocation5 + $0x8] sm:$0xff]
    %v62 = vld [vmem:[#allocation5 + $0x10] sm:$0xff]
    %v63 = vld [vmem:[#allocation5 + $0x18] sm:$0xff]
    %v64 = vld [vmem:[#allocation5 + $0x20] sm:$0xff]
    %v65 = vld [vmem:[#allocation5 + $0x28] sm:$0xff]
    %v66 = vld [vmem:[#allocation5 + $0x30] sm:$0xff]
    %v67 = vld [vmem:[#allocation5 + $0x38] sm:$0xff]
    %v68 = vld [vmem:[%s2] sm:$0x1]
    %v70 = vlaneseq
    %v71 = vshrl.u32 %v70, 7
    %v72 = vsub.s32 0, %v71
    %v73 = vrot.slane %v68, %v72
    %v75 = vld [vmem:[%s4] sm:$0x1]
    %v77 = vlaneseq
    %v78 = vshrl.u32 %v77, 7
    %v79 = vsub.s32 0, %v78
    %v80 = vrot.slane %v75, %v79
    %v82 = vld [vmem:[#allocation2] sm:$0xff]
    %v83 = vld [vmem:[#allocation2 + $0x8] sm:$0xff]
    %v86 = vrot.slane %v83, 7
    %vm87 = vcmask 1041409
    %v88 = vsel %vm87, %v86, %v82
    %vm90 = vcmask 64512
    %v91 = vsel %vm90, %v88, 0.0
    %vm92 = vcmask 326656
    %v94 = vsel %vm92, %v91, 0
    %96 = vmatprep.subr.mxu0 0.0
    %97 = vmatpush1.msra.mxu0 %v55
    %98 = vmatprep.subr.mxu0 0.0
    %99 = vmatpush1.msra.mxu0 %v56
    %100 = vmatprep.subr.mxu0 0.0
    %101 = vmatpush1.msra.mxu0 %v57
    %102 = vmatprep.subr.mxu0 0.0
    %103 = vmatpush1.msra.mxu0 %v58
    %104 = vmatprep.subr.mxu0 0.0
    %105 = vmatpush1.msra.mxu0 %v59
    %106 = vmatprep.subr.mxu0 0.0
    %107 = vmatpush1.msra.mxu0 0.0
    %108 = vmatprep.subr.mxu0 0.0
    %109 = vmatpush1.msra.mxu0 0.0
    %110 = vmatprep.subr.mxu0 0.0
    %111 = vmatpush1.msra.mxu0 0.0
    %112 = vmatprep.subr.mxu0 0.0
    %113 = vmatpush1.msra.mxu0 0.0
    %114 = vmatprep.subr.mxu0 0.0
    %115 = vmatpush1.msra.mxu0 0.0
    %116 = vmatprep.subr.mxu0 0.0
    %117 = vmatpush1.msra.mxu0 0.0
    %118 = vmatprep.subr.mxu0 0.0
    %119 = vmatpush1.msra.mxu0 0.0
    %120 = vmatprep.subr.mxu0 0.0
    %121 = vmatpush1.msra.mxu0 0.0
    %122 = vmatprep.subr.mxu0 0.0
    %123 = vmatpush1.msra.mxu0 0.0
    %124 = vmatprep.subr.mxu0 0.0
    %125 = vmatpush1.msra.mxu0 0.0
    %126 = vmatprep.subr.mxu0 0.0
    %127 = vmatpush1.msra.mxu0 0.0
    %128 = vmatprep.subr.mxu0 0.0
    %129 = vmatpush1.msra.mxu0 0.0
    %130 = vmatprep.subr.mxu0 0.0
    %131 = vmatpush1.msra.mxu0 0.0
    %132 = vmatprep.subr.mxu0 0.0
    %133 = vmatpush1.msra.mxu0 0.0
    %134 = vmatprep.subr.mxu0 0.0
    %135 = vmatpush1.msra.mxu0 0.0
    %136 = vmatprep.subr.mxu0 0.0
    %137 = vmatpush1.msra.mxu0 0.0
    %138 = vmatprep.subr.mxu0 0.0
    %139 = vmatpush1.msra.mxu0 0.0
    %140 = vmatprep.subr.mxu0 0.0
    %141 = vmatpush1.msra.mxu0 0.0
    %142 = vmatprep.subr.mxu0 0.0
    %143 = vmatpush1.msra.mxu0 0.0
    %144 = vmatprep.subr.mxu0 0.0
    %145 = vmatpush1.msra.mxu0 0.0
    %146 = vmatprep.subr.mxu0 0.0
    %147 = vmatpush1.msra.mxu0 0.0
    %148 = vmatprep.subr.mxu0 0.0
    %149 = vmatpush1.msra.mxu0 0.0
    %150 = vmatprep.subr.mxu0 0.0
    %151 = vmatpush1.msra.mxu0 0.0
    %152 = vmatprep.subr.mxu0 0.0
    %153 = vmatpush1.msra.mxu0 0.0
    %154 = vmatprep.subr.mxu0 0.0
    %155 = vmatpush1.msra.mxu0 0.0
    %156 = vmatprep.subr.mxu0 0.0
    %157 = vmatpush1.msra.mxu0 0.0
    %158 = vmatprep.subr.mxu0 0.0
    %159 = vmatpush1.msra.mxu0 0.0
    %160 = vmatprep.mubr.f32.mxu0 0.0
    %161 = vmatmul.mubr.f32.gmra.mrb[0].mxu0 %v94
    %v162 = vpop.f32.mrb[0].mxu0
    %v163 = vadd.f32 %v73, %v162
    %v164 = vpop.f32.mrb[0].mxu0
    %165 = vdwg.mxu0
    %v166 = vxor.u32 %v163, 2147483648
    %v167 = vmul.f32 %v166, 1.442695
    %v168 = vpow.pop %v167
    %v169 = vadd.f32 %v168, 1.0
    %v170 = vrcp.pop %v169
    %v171 = vmul.f32 1.0, %v170
    %v172 = vtanh.pop %v163
    %v173 = vmul.f32 %v171, 0.0
    %175 = vrot.lane.b32.xlu0 %v172, 64
    %v176 = vpop.permute.xlu0 %175
    %v178 = vmul.f32 %v171, %v176
    %180 = vrot.lane.b32.xlu0 %v178, 32
    %v181 = vpop.permute.xlu0 %180
    %v183 = vadd.f32 %v173, %v181
    %v184 = vtanh.pop %v183
    %186 = vrot.lane.b32.xlu0 %v184, 64
    %v187 = vpop.permute.xlu0 %186
    %v189 = vmul.f32 %v171, %v187
    %191 = vrot.lane.b32.xlu0 %v189, 32
    %v192 = vpop.permute.xlu0 %191
    %vm194 = vcmask 261120
    %v195 = vsel %vm194, %v192, 0.0
    %vm196 = vcmask 523264
    %v198 = vsel %vm196, %v195, 0
    %200 = vmatprep.subr.mxu0 0.0
    %201 = vmatpush1.msra.mxu0 %v60
    %202 = vmatprep.subr.mxu0 0.0
    %203 = vmatpush1.msra.mxu0 %v61
    %204 = vmatprep.subr.mxu0 0.0
    %205 = vmatpush1.msra.mxu0 %v62
    %206 = vmatprep.subr.mxu0 0.0
    %207 = vmatpush1.msra.mxu0 %v63
    %208 = vmatprep.subr.mxu0 0.0
    %209 = vmatpush1.msra.mxu0 %v64
    %210 = vmatprep.subr.mxu0 0.0
    %211 = vmatpush1.msra.mxu0 %v65
    %212 = vmatprep.subr.mxu0 0.0
    %213 = vmatpush1.msra.mxu0 %v66
    %214 = vmatprep.subr.mxu0 0.0
    %215 = vmatpush1.msra.mxu0 %v67
    %216 = vmatprep.subr.mxu0 0.0
    %217 = vmatpush1.msra.mxu0 0.0
    %218 = vmatprep.subr.mxu0 0.0
    %219 = vmatpush1.msra.mxu0 0.0
    %220 = vmatprep.subr.mxu0 0.0
    %221 = vmatpush1.msra.mxu0 0.0
    %222 = vmatprep.subr.mxu0 0.0
    %223 = vmatpush1.msra.mxu0 0.0
    %224 = vmatprep.subr.mxu0 0.0
    %225 = vmatpush1.msra.mxu0 0.0
    %226 = vmatprep.subr.mxu0 0.0
    %227 = vmatpush1.msra.mxu0 0.0
    %228 = vmatprep.subr.mxu0 0.0
    %229 = vmatpush1.msra.mxu0 0.0
    %230 = vmatprep.subr.mxu0 0.0
    %231 = vmatpush1.msra.mxu0 0.0
    %232 = vmatprep.subr.mxu0 0.0
    %233 = vmatpush1.msra.mxu0 0.0
    %234 = vmatprep.subr.mxu0 0.0
    %235 = vmatpush1.msra.mxu0 0.0
    %236 = vmatprep.subr.mxu0 0.0
    %237 = vmatpush1.msra.mxu0 0.0
    %238 = vmatprep.subr.mxu0 0.0
    %239 = vmatpush1.msra.mxu0 0.0
    %240 = vmatprep.subr.mxu0 0.0
    %241 = vmatpush1.msra.mxu0 0.0
    %242 = vmatprep.subr.mxu0 0.0
    %243 = vmatpush1.msra.mxu0 0.0
    %244 = vmatprep.subr.mxu0 0.0
    %245 = vmatpush1.msra.mxu0 0.0
    %246 = vmatprep.subr.mxu0 0.0
    %247 = vmatpush1.msra.mxu0 0.0
    %248 = vmatprep.subr.mxu0 0.0
    %249 = vmatpush1.msra.mxu0 0.0
    %250 = vmatprep.subr.mxu0 0.0
    %251 = vmatpush1.msra.mxu0 0.0
    %252 = vmatprep.subr.mxu0 0.0
    %253 = vmatpush1.msra.mxu0 0.0
    %254 = vmatprep.subr.mxu0 0.0
    %255 = vmatpush1.msra.mxu0 0.0
    %256 = vmatprep.subr.mxu0 0.0
    %257 = vmatpush1.msra.mxu0 0.0
    %258 = vmatprep.subr.mxu0 0.0
    %259 = vmatpush1.msra.mxu0 0.0
    %260 = vmatprep.subr.mxu0 0.0
    %261 = vmatpush1.msra.mxu0 0.0
    %262 = vmatprep.subr.mxu0 0.0
    %263 = vmatpush1.msra.mxu0 0.0
    %264 = vmatprep.mubr.f32.mxu0 0.0
    %265 = vmatmul.mubr.f32.gmra.mrb[0].mxu0 %v198
    %v266 = vpop.f32.mrb[0].mxu0
    %v267 = vadd.f32 %v80, %v266
    %v268 = vpop.f32.mrb[0].mxu0
    %269 = vdwg.mxu0
    %v270 = vxor.u32 %v267, 2147483648
    %v271 = vmul.f32 %v270, 1.442695
    %v272 = vpow.pop %v271
    %v273 = vadd.f32 %v272, 1.0
    %v274 = vrcp.pop %v273
    %v275 = vmul.f32 1.0, %v274
    %v276 = vtanh.pop %v267
    %v277 = vmul.f32 %v275, 0.0
    %279 = vrot.lane.b32.xlu0 %v276, 64
    %v280 = vpop.permute.xlu0 %279
    %v282 = vmul.f32 %v275, %v280
    %284 = vrot.lane.b32.xlu0 %v282, 32
    %v285 = vpop.permute.xlu0 %284
    %v287 = vadd.f32 %v277, %v285
    %v288 = vtanh.pop %v287
    %290 = vrot.lane.b32.xlu0 %v288, 64
    %v291 = vpop.permute.xlu0 %290
    %v293 = vmul.f32 %v275, %v291
    %vm294 = vcmask 1042434
    %v295 = vsel %vm294, %v86, %v82
    %v297 = vrot.slane %v189, 7
    %298 = vrot.lane.b32.xlu0 %v297, 40
    %v299 = vpop.permute.xlu0 %298
    %v301 = vsel %vm90, %v295, %v299
    %v303 = vrot.slane %v301, 1
    %v304 = vsel %vm92, %v303, 0
    %306 = vmatprep.subr.mxu0 0.0
    %307 = vmatpush1.msra.mxu0 %v55
    %308 = vmatprep.subr.mxu0 0.0
    %309 = vmatpush1.msra.mxu0 %v56
    %310 = vmatprep.subr.mxu0 0.0
    %311 = vmatpush1.msra.mxu0 %v57
    %312 = vmatprep.subr.mxu0 0.0
    %313 = vmatpush1.msra.mxu0 %v58
    %314 = vmatprep.subr.mxu0 0.0
    %315 = vmatpush1.msra.mxu0 %v59
    %316 = vmatprep.subr.mxu0 0.0
    %317 = vmatpush1.msra.mxu0 0.0
    %318 = vmatprep.subr.mxu0 0.0
    %319 = vmatpush1.msra.mxu0 0.0
    %320 = vmatprep.subr.mxu0 0.0
    %321 = vmatpush1.msra.mxu0 0.0
    %322 = vmatprep.subr.mxu0 0.0
    %323 = vmatpush1.msra.mxu0 0.0
    %324 = vmatprep.subr.mxu0 0.0
    %325 = vmatpush1.msra.mxu0 0.0
    %326 = vmatprep.subr.mxu0 0.0
    %327 = vmatpush1.msra.mxu0 0.0
    %328 = vmatprep.subr.mxu0 0.0
    %329 = vmatpush1.msra.mxu0 0.0
    %330 = vmatprep.subr.mxu0 0.0
    %331 = vmatpush1.msra.mxu0 0.0
    %332 = vmatprep.subr.mxu0 0.0
    %333 = vmatpush1.msra.mxu0 0.0
    %334 = vmatprep.subr.mxu0 0.0
    %335 = vmatpush1.msra.mxu0 0.0
    %336 = vmatprep.subr.mxu0 0.0
    %337 = vmatpush1.msra.mxu0 0.0
    %338 = vmatprep.subr.mxu0 0.0
    %339 = vmatpush1.msra.mxu0 0.0
    %340 = vmatprep.subr.mxu0 0.0
    %341 = vmatpush1.msra.mxu0 0.0
    %342 = vmatprep.subr.mxu0 0.0
    %343 = vmatpush1.msra.mxu0 0.0
    %344 = vmatprep.subr.mxu0 0.0
    %345 = vmatpush1.msra.mxu0 0.0
    %346 = vmatprep.subr.mxu0 0.0
    %347 = vmatpush1.msra.mxu0 0.0
    %348 = vmatprep.subr.mxu0 0.0
    %349 = vmatpush1.msra.mxu0 0.0
    %350 = vmatprep.subr.mxu0 0.0
    %351 = vmatpush1.msra.mxu0 0.0
    %352 = vmatprep.subr.mxu0 0.0
    %353 = vmatpush1.msra.mxu0 0.0
    %354 = vmatprep.subr.mxu0 0.0
    %355 = vmatpush1.msra.mxu0 0.0
    %356 = vmatprep.subr.mxu0 0.0
    %357 = vmatpush1.msra.mxu0 0.0
    %358 = vmatprep.subr.mxu0 0.0
    %359 = vmatpush1.msra.mxu0 0.0
    %360 = vmatprep.subr.mxu0 0.0
    %361 = vmatpush1.msra.mxu0 0.0
    %362 = vmatprep.subr.mxu0 0.0
    %363 = vmatpush1.msra.mxu0 0.0
    %364 = vmatprep.subr.mxu0 0.0
    %365 = vmatpush1.msra.mxu0 0.0
    %366 = vmatprep.subr.mxu0 0.0
    %367 = vmatpush1.msra.mxu0 0.0
    %368 = vmatprep.subr.mxu0 0.0
    %369 = vmatpush1.msra.mxu0 0.0
    %370 = vmatprep.mubr.f32.mxu0 0.0
    %371 = vmatmul.mubr.f32.gmra.mrb[0].mxu0 %v304
    %v372 = vpop.f32.mrb[0].mxu0
    %v373 = vadd.f32 %v73, %v372
    %v374 = vpop.f32.mrb[0].mxu0
    %375 = vdwg.mxu0
    %v376 = vxor.u32 %v373, 2147483648
    %v377 = vmul.f32 %v376, 1.442695
    %v378 = vpow.pop %v377
    %v379 = vadd.f32 %v378, 1.0
    %v380 = vrcp.pop %v379
    %v381 = vmul.f32 1.0, %v380
    %v382 = vtanh.pop %v373
    %v383 = vmul.f32 %v381, %v183
    %385 = vrot.lane.b32.xlu0 %v382, 64
    %v386 = vpop.permute.xlu0 %385
    %v388 = vmul.f32 %v381, %v386
    %390 = vrot.lane.b32.xlu0 %v388, 32
    %v391 = vpop.permute.xlu0 %390
    %v393 = vadd.f32 %v383, %v391
    %v394 = vtanh.pop %v393
    %396 = vrot.lane.b32.xlu0 %v394, 64
    %v397 = vpop.permute.xlu0 %396
    %v399 = vmul.f32 %v381, %v397
    %401 = vrot.lane.b32.xlu0 %v399, 32
    %v402 = vpop.permute.xlu0 %401
    %405 = vrot.lane.b32.xlu0 %v293, 64
    %v406 = vpop.permute.xlu0 %405
    %v408 = vsel %vm194, %v402, %v406
    %v410 = vsel %vm196, %v408, 0
    %412 = vmatprep.subr.mxu0 0.0
    %413 = vmatpush1.msra.mxu0 %v60
    %414 = vmatprep.subr.mxu0 0.0
    %415 = vmatpush1.msra.mxu0 %v61
    %416 = vmatprep.subr.mxu0 0.0
    %417 = vmatpush1.msra.mxu0 %v62
    %418 = vmatprep.subr.mxu0 0.0
    %419 = vmatpush1.msra.mxu0 %v63
    %420 = vmatprep.subr.mxu0 0.0
    %421 = vmatpush1.msra.mxu0 %v64
    %422 = vmatprep.subr.mxu0 0.0
    %423 = vmatpush1.msra.mxu0 %v65
    %424 = vmatprep.subr.mxu0 0.0
    %425 = vmatpush1.msra.mxu0 %v66
    %426 = vmatprep.subr.mxu0 0.0
    %427 = vmatpush1.msra.mxu0 %v67
    %428 = vmatprep.subr.mxu0 0.0
    %429 = vmatpush1.msra.mxu0 0.0
    %430 = vmatprep.subr.mxu0 0.0
    %431 = vmatpush1.msra.mxu0 0.0
    %432 = vmatprep.subr.mxu0 0.0
    %433 = vmatpush1.msra.mxu0 0.0
    %434 = vmatprep.subr.mxu0 0.0
    %435 = vmatpush1.msra.mxu0 0.0
    %436 = vmatprep.subr.mxu0 0.0
    %437 = vmatpush1.msra.mxu0 0.0
    %438 = vmatprep.subr.mxu0 0.0
    %439 = vmatpush1.msra.mxu0 0.0
    %440 = vmatprep.subr.mxu0 0.0
    %441 = vmatpush1.msra.mxu0 0.0
    %442 = vmatprep.subr.mxu0 0.0
    %443 = vmatpush1.msra.mxu0 0.0
    %444 = vmatprep.subr.mxu0 0.0
    %445 = vmatpush1.msra.mxu0 0.0
    %446 = vmatprep.subr.mxu0 0.0
    %447 = vmatpush1.msra.mxu0 0.0
    %448 = vmatprep.subr.mxu0 0.0
    %449 = vmatpush1.msra.mxu0 0.0
    %450 = vmatprep.subr.mxu0 0.0
    %451 = vmatpush1.msra.mxu0 0.0
    %452 = vmatprep.subr.mxu0 0.0
    %453 = vmatpush1.msra.mxu0 0.0
    %454 = vmatprep.subr.mxu0 0.0
    %455 = vmatpush1.msra.mxu0 0.0
    %456 = vmatprep.subr.mxu0 0.0
    %457 = vmatpush1.msra.mxu0 0.0
    %458 = vmatprep.subr.mxu0 0.0
    %459 = vmatpush1.msra.mxu0 0.0
    %460 = vmatprep.subr.mxu0 0.0
    %461 = vmatpush1.msra.mxu0 0.0
    %462 = vmatprep.subr.mxu0 0.0
    %463 = vmatpush1.msra.mxu0 0.0
    %464 = vmatprep.subr.mxu0 0.0
    %465 = vmatpush1.msra.mxu0 0.0
    %466 = vmatprep.subr.mxu0 0.0
    %467 = vmatpush1.msra.mxu0 0.0
    %468 = vmatprep.subr.mxu0 0.0
    %469 = vmatpush1.msra.mxu0 0.0
    %470 = vmatprep.subr.mxu0 0.0
    %471 = vmatpush1.msra.mxu0 0.0
    %472 = vmatprep.subr.mxu0 0.0
    %473 = vmatpush1.msra.mxu0 0.0
    %474 = vmatprep.subr.mxu0 0.0
    %475 = vmatpush1.msra.mxu0 0.0
    %476 = vmatprep.mubr.f32.mxu0 0.0
    %477 = vmatmul.mubr.f32.gmra.mrb[0].mxu0 %v410
    %v478 = vpop.f32.mrb[0].mxu0
    %v479 = vadd.f32 %v80, %v478
    %v480 = vpop.f32.mrb[0].mxu0
    %481 = vdwg.mxu0
    %v482 = vxor.u32 %v479, 2147483648
    %v483 = vmul.f32 %v482, 1.442695
    %v484 = vpow.pop %v483
    %v485 = vadd.f32 %v484, 1.0
    %v486 = vrcp.pop %v485
    %v487 = vmul.f32 1.0, %v486
    %v488 = vtanh.pop %v479
    %v489 = vmul.f32 %v487, %v287
    %491 = vrot.lane.b32.xlu0 %v488, 64
    %v492 = vpop.permute.xlu0 %491
    %v494 = vmul.f32 %v487, %v492
    %496 = vrot.lane.b32.xlu0 %v494, 32
    %v497 = vpop.permute.xlu0 %496
    %v499 = vadd.f32 %v489, %v497
    %v500 = vtanh.pop %v499
    %502 = vrot.lane.b32.xlu0 %v500, 64
    %v503 = vpop.permute.xlu0 %502
    %v505 = vmul.f32 %v487, %v503
    %vm506 = vcmask 1043459
    %v507 = vsel %vm506, %v86, %v82
    %v509 = vrot.slane %v399, 6
    %510 = vrot.lane.b32.xlu0 %v509, 40
    %v511 = vpop.permute.xlu0 %510
    %v513 = vsel %vm90, %v507, %v511
    %v515 = vrot.slane %v513, 2
    %v516 = vsel %vm92, %v515, 0
    %518 = vmatprep.subr.mxu0 0.0
    %519 = vmatpush1.msra.mxu0 %v55
    %520 = vmatprep.subr.mxu0 0.0
    %521 = vmatpush1.msra.mxu0 %v56
    %522 = vmatprep.subr.mxu0 0.0
    %523 = vmatpush1.msra.mxu0 %v57
    %524 = vmatprep.subr.mxu0 0.0
    %525 = vmatpush1.msra.mxu0 %v58
    %526 = vmatprep.subr.mxu0 0.0
    %527 = vmatpush1.msra.mxu0 %v59
    %528 = vmatprep.subr.mxu0 0.0
    %529 = vmatpush1.msra.mxu0 0.0
    %530 = vmatprep.subr.mxu0 0.0
    %531 = vmatpush1.msra.mxu0 0.0
    %532 = vmatprep.subr.mxu0 0.0
    %533 = vmatpush1.msra.mxu0 0.0
    %534 = vmatprep.subr.mxu0 0.0
    %535 = vmatpush1.msra.mxu0 0.0
    %536 = vmatprep.subr.mxu0 0.0
    %537 = vmatpush1.msra.mxu0 0.0
    %538 = vmatprep.subr.mxu0 0.0
    %539 = vmatpush1.msra.mxu0 0.0
    %540 = vmatprep.subr.mxu0 0.0
    %541 = vmatpush1.msra.mxu0 0.0
    %542 = vmatprep.subr.mxu0 0.0
    %543 = vmatpush1.msra.mxu0 0.0
    %544 = vmatprep.subr.mxu0 0.0
    %545 = vmatpush1.msra.mxu0 0.0
    %546 = vmatprep.subr.mxu0 0.0
    %547 = vmatpush1.msra.mxu0 0.0
    %548 = vmatprep.subr.mxu0 0.0
    %549 = vmatpush1.msra.mxu0 0.0
    %550 = vmatprep.subr.mxu0 0.0
    %551 = vmatpush1.msra.mxu0 0.0
    %552 = vmatprep.subr.mxu0 0.0
    %553 = vmatpush1.msra.mxu0 0.0
    %554 = vmatprep.subr.mxu0 0.0
    %555 = vmatpush1.msra.mxu0 0.0
    %556 = vmatprep.subr.mxu0 0.0
    %557 = vmatpush1.msra.mxu0 0.0
    %558 = vmatprep.subr.mxu0 0.0
    %559 = vmatpush1.msra.mxu0 0.0
    %560 = vmatprep.subr.mxu0 0.0
    %561 = vmatpush1.msra.mxu0 0.0
    %562 = vmatprep.subr.mxu0 0.0
    %563 = vmatpush1.msra.mxu0 0.0
    %564 = vmatprep.subr.mxu0 0.0
    %565 = vmatpush1.msra.mxu0 0.0
    %566 = vmatprep.subr.mxu0 0.0
    %567 = vmatpush1.msra.mxu0 0.0
    %568 = vmatprep.subr.mxu0 0.0
    %569 = vmatpush1.msra.mxu0 0.0
    %570 = vmatprep.subr.mxu0 0.0
    %571 = vmatpush1.msra.mxu0 0.0
    %572 = vmatprep.subr.mxu0 0.0
    %573 = vmatpush1.msra.mxu0 0.0
    %574 = vmatprep.subr.mxu0 0.0
    %575 = vmatpush1.msra.mxu0 0.0
    %576 = vmatprep.subr.mxu0 0.0
    %577 = vmatpush1.msra.mxu0 0.0
    %578 = vmatprep.subr.mxu0 0.0
    %579 = vmatpush1.msra.mxu0 0.0
    %580 = vmatprep.subr.mxu0 0.0
    %581 = vmatpush1.msra.mxu0 0.0
    %582 = vmatprep.mubr.f32.mxu0 0.0
    %583 = vmatmul.mubr.f32.gmra.mrb[0].mxu0 %v516
    %v584 = vpop.f32.mrb[0].mxu0
    %v585 = vadd.f32 %v73, %v584
    %v586 = vpop.f32.mrb[0].mxu0
    %587 = vdwg.mxu0
    %v588 = vxor.u32 %v585, 2147483648
    %v589 = vmul.f32 %v588, 1.442695
    %v590 = vpow.pop %v589
    %v591 = vadd.f32 %v590, 1.0
    %v592 = vrcp.pop %v591
    %v593 = vmul.f32 1.0, %v592
    %v594 = vtanh.pop %v585
    %v595 = vmul.f32 %v593, %v393
    %597 = vrot.lane.b32.xlu0 %v594, 64
    %v598 = vpop.permute.xlu0 %597
    %v600 = vmul.f32 %v593, %v598
    %602 = vrot.lane.b32.xlu0 %v600, 32
    %v603 = vpop.permute.xlu0 %602
    %v605 = vadd.f32 %v595, %v603
    %v606 = vtanh.pop %v605
    %608 = vrot.lane.b32.xlu0 %v606, 64
    %v609 = vpop.permute.xlu0 %608
    %v611 = vmul.f32 %v593, %v609
    %613 = vrot.lane.b32.xlu0 %v611, 32
    %v614 = vpop.permute.xlu0 %613
    %617 = vrot.lane.b32.xlu0 %v505, 64
    %v618 = vpop.permute.xlu0 %617
    %v620 = vsel %vm194, %v614, %v618
    %v622 = vsel %vm196, %v620, 0
    %624 = vmatprep.subr.mxu0 0.0
    %625 = vmatpush1.msra.mxu0 %v60
    %626 = vmatprep.subr.mxu0 0.0
    %627 = vmatpush1.msra.mxu0 %v61
    %628 = vmatprep.subr.mxu0 0.0
    %629 = vmatpush1.msra.mxu0 %v62
    %630 = vmatprep.subr.mxu0 0.0
    %631 = vmatpush1.msra.mxu0 %v63
    %632 = vmatprep.subr.mxu0 0.0
    %633 = vmatpush1.msra.mxu0 %v64
    %634 = vmatprep.subr.mxu0 0.0
    %635 = vmatpush1.msra.mxu0 %v65
    %636 = vmatprep.subr.mxu0 0.0
    %637 = vmatpush1.msra.mxu0 %v66
    %638 = vmatprep.subr.mxu0 0.0
    %639 = vmatpush1.msra.mxu0 %v67
    %640 = vmatprep.subr.mxu0 0.0
    %641 = vmatpush1.msra.mxu0 0.0
    %642 = vmatprep.subr.mxu0 0.0
    %643 = vmatpush1.msra.mxu0 0.0
    %644 = vmatprep.subr.mxu0 0.0
    %645 = vmatpush1.msra.mxu0 0.0
    %646 = vmatprep.subr.mxu0 0.0
    %647 = vmatpush1.msra.mxu0 0.0
    %648 = vmatprep.subr.mxu0 0.0
    %649 = vmatpush1.msra.mxu0 0.0
    %650 = vmatprep.subr.mxu0 0.0
    %651 = vmatpush1.msra.mxu0 0.0
    %652 = vmatprep.subr.mxu0 0.0
    %653 = vmatpush1.msra.mxu0 0.0
    %654 = vmatprep.subr.mxu0 0.0
    %655 = vmatpush1.msra.mxu0 0.0
    %656 = vmatprep.subr.mxu0 0.0
    %657 = vmatpush1.msra.mxu0 0.0
    %658 = vmatprep.subr.mxu0 0.0
    %659 = vmatpush1.msra.mxu0 0.0
    %660 = vmatprep.subr.mxu0 0.0
    %661 = vmatpush1.msra.mxu0 0.0
    %662 = vmatprep.subr.mxu0 0.0
    %663 = vmatpush1.msra.mxu0 0.0
    %664 = vmatprep.subr.mxu0 0.0
    %665 = vmatpush1.msra.mxu0 0.0
    %666 = vmatprep.subr.mxu0 0.0
    %667 = vmatpush1.msra.mxu0 0.0
    %668 = vmatprep.subr.mxu0 0.0
    %669 = vmatpush1.msra.mxu0 0.0
    %670 = vmatprep.subr.mxu0 0.0
    %671 = vmatpush1.msra.mxu0 0.0
    %672 = vmatprep.subr.mxu0 0.0
    %673 = vmatpush1.msra.mxu0 0.0
    %674 = vmatprep.subr.mxu0 0.0
    %675 = vmatpush1.msra.mxu0 0.0
    %676 = vmatprep.subr.mxu0 0.0
    %677 = vmatpush1.msra.mxu0 0.0
    %678 = vmatprep.subr.mxu0 0.0
    %679 = vmatpush1.msra.mxu0 0.0
    %680 = vmatprep.subr.mxu0 0.0
    %681 = vmatpush1.msra.mxu0 0.0
    %682 = vmatprep.subr.mxu0 0.0
    %683 = vmatpush1.msra.mxu0 0.0
    %684 = vmatprep.subr.mxu0 0.0
    %685 = vmatpush1.msra.mxu0 0.0
    %686 = vmatprep.subr.mxu0 0.0
    %687 = vmatpush1.msra.mxu0 0.0
    %688 = vmatprep.mubr.f32.mxu0 0.0
    %689 = vmatmul.mubr.f32.gmra.mrb[0].mxu0 %v622
    %v690 = vpop.f32.mrb[0].mxu0
    %v691 = vadd.f32 %v80, %v690
    %v692 = vpop.f32.mrb[0].mxu0
    %693 = vdwg.mxu0
    %v694 = vxor.u32 %v691, 2147483648
    %v695 = vmul.f32 %v694, 1.442695
    %v696 = vpow.pop %v695
    %v697 = vadd.f32 %v696, 1.0
    %v698 = vrcp.pop %v697
    %v699 = vmul.f32 1.0, %v698
    %v700 = vtanh.pop %v691
    %v701 = vmul.f32 %v699, %v499
    %703 = vrot.lane.b32.xlu0 %v700, 64
    %v704 = vpop.permute.xlu0 %703
    %v706 = vmul.f32 %v699, %v704
    %708 = vrot.lane.b32.xlu0 %v706, 32
    %v709 = vpop.permute.xlu0 %708
    %v711 = vadd.f32 %v701, %v709
    %v712 = vtanh.pop %v711
    %714 = vrot.lane.b32.xlu0 %v712, 64
    %v715 = vpop.permute.xlu0 %714
    %v717 = vmul.f32 %v699, %v715
    %vm718 = vcmask 1044484
    %v719 = vsel %vm718, %v86, %v82
    %v721 = vrot.slane %v611, 5
    %722 = vrot.lane.b32.xlu0 %v721, 40
    %v723 = vpop.permute.xlu0 %722
    %v725 = vsel %vm90, %v719, %v723
    %v727 = vrot.slane %v725, 3
    %v728 = vsel %vm92, %v727, 0
    %730 = vmatprep.subr.mxu0 0.0
    %731 = vmatpush1.msra.mxu0 %v55
    %732 = vmatprep.subr.mxu0 0.0
    %733 = vmatpush1.msra.mxu0 %v56
    %734 = vmatprep.subr.mxu0 0.0
    %735 = vmatpush1.msra.mxu0 %v57
    %736 = vmatprep.subr.mxu0 0.0
    %737 = vmatpush1.msra.mxu0 %v58
    %738 = vmatprep.subr.mxu0 0.0
    %739 = vmatpush1.msra.mxu0 %v59
    %740 = vmatprep.subr.mxu0 0.0
    %741 = vmatpush1.msra.mxu0 0.0
    %742 = vmatprep.subr.mxu0 0.0
    %743 = vmatpush1.msra.mxu0 0.0
    %744 = vmatprep.subr.mxu0 0.0
    %745 = vmatpush1.msra.mxu0 0.0
    %746 = vmatprep.subr.mxu0 0.0
    %747 = vmatpush1.msra.mxu0 0.0
    %748 = vmatprep.subr.mxu0 0.0
    %749 = vmatpush1.msra.mxu0 0.0
    %750 = vmatprep.subr.mxu0 0.0
    %751 = vmatpush1.msra.mxu0 0.0
    %752 = vmatprep.subr.mxu0 0.0
    %753 = vmatpush1.msra.mxu0 0.0
    %754 = vmatprep.subr.mxu0 0.0
    %755 = vmatpush1.msra.mxu0 0.0
    %756 = vmatprep.subr.mxu0 0.0
    %757 = vmatpush1.msra.mxu0 0.0
    %758 = vmatprep.subr.mxu0 0.0
    %759 = vmatpush1.msra.mxu0 0.0
    %760 = vmatprep.subr.mxu0 0.0
    %761 = vmatpush1.msra.mxu0 0.0
    %762 = vmatprep.subr.mxu0 0.0
    %763 = vmatpush1.msra.mxu0 0.0
    %764 = vmatprep.subr.mxu0 0.0
    %765 = vmatpush1.msra.mxu0 0.0
    %766 = vmatprep.subr.mxu0 0.0
    %767 = vmatpush1.msra.mxu0 0.0
    %768 = vmatprep.subr.mxu0 0.0
    %769 = vmatpush1.msra.mxu0 0.0
    %770 = vmatprep.subr.mxu0 0.0
    %771 = vmatpush1.msra.mxu0 0.0
    %772 = vmatprep.subr.mxu0 0.0
    %773 = vmatpush1.msra.mxu0 0.0
    %774 = vmatprep.subr.mxu0 0.0
    %775 = vmatpush1.msra.mxu0 0.0
    %776 = vmatprep.subr.mxu0 0.0
    %777 = vmatpush1.msra.mxu0 0.0
    %778 = vmatprep.subr.mxu0 0.0
    %779 = vmatpush1.msra.mxu0 0.0
    %780 = vmatprep.subr.mxu0 0.0
    %781 = vmatpush1.msra.mxu0 0.0
    %782 = vmatprep.subr.mxu0 0.0
    %783 = vmatpush1.msra.mxu0 0.0
    %784 = vmatprep.subr.mxu0 0.0
    %785 = vmatpush1.msra.mxu0 0.0
    %786 = vmatprep.subr.mxu0 0.0
    %787 = vmatpush1.msra.mxu0 0.0
    %788 = vmatprep.subr.mxu0 0.0
    %789 = vmatpush1.msra.mxu0 0.0
    %790 = vmatprep.subr.mxu0 0.0
    %791 = vmatpush1.msra.mxu0 0.0
    %792 = vmatprep.subr.mxu0 0.0
    %793 = vmatpush1.msra.mxu0 0.0
    %794 = vmatprep.mubr.f32.mxu0 0.0
    %795 = vmatmul.mubr.f32.gmra.mrb[0].mxu0 %v728
    %v796 = vpop.f32.mrb[0].mxu0
    %v797 = vadd.f32 %v73, %v796
    %v798 = vpop.f32.mrb[0].mxu0
    %799 = vdwg.mxu0
    %v800 = vxor.u32 %v797, 2147483648
    %v801 = vmul.f32 %v800, 1.442695
    %v802 = vpow.pop %v801
    %v803 = vadd.f32 %v802, 1.0
    %v804 = vrcp.pop %v803
    %v805 = vmul.f32 1.0, %v804
    %v806 = vtanh.pop %v797
    %v807 = vmul.f32 %v805, %v605
    %809 = vrot.lane.b32.xlu0 %v806, 64
    %v810 = vpop.permute.xlu0 %809
    %v812 = vmul.f32 %v805, %v810
    %814 = vrot.lane.b32.xlu0 %v812, 32
    %v815 = vpop.permute.xlu0 %814
    %v817 = vadd.f32 %v807, %v815
    %v818 = vtanh.pop %v817
    %820 = vrot.lane.b32.xlu0 %v818, 64
    %v821 = vpop.permute.xlu0 %820
    %v823 = vmul.f32 %v805, %v821
    %825 = vrot.lane.b32.xlu0 %v823, 32
    %v826 = vpop.permute.xlu0 %825
    %829 = vrot.lane.b32.xlu0 %v717, 64
    %v830 = vpop.permute.xlu0 %829
    %v832 = vsel %vm194, %v826, %v830
    %v834 = vsel %vm196, %v832, 0
    %836 = vmatprep.subr.mxu0 0.0
    %837 = vmatpush1.msra.mxu0 %v60
    %838 = vmatprep.subr.mxu0 0.0
    %839 = vmatpush1.msra.mxu0 %v61
    %840 = vmatprep.subr.mxu0 0.0
    %841 = vmatpush1.msra.mxu0 %v62
    %842 = vmatprep.subr.mxu0 0.0
    %843 = vmatpush1.msra.mxu0 %v63
    %844 = vmatprep.subr.mxu0 0.0
    %845 = vmatpush1.msra.mxu0 %v64
    %846 = vmatprep.subr.mxu0 0.0
    %847 = vmatpush1.msra.mxu0 %v65
    %848 = vmatprep.subr.mxu0 0.0
    %849 = vmatpush1.msra.mxu0 %v66
    %850 = vmatprep.subr.mxu0 0.0
    %851 = vmatpush1.msra.mxu0 %v67
    %852 = vmatprep.subr.mxu0 0.0
    %853 = vmatpush1.msra.mxu0 0.0
    %854 = vmatprep.subr.mxu0 0.0
    %855 = vmatpush1.msra.mxu0 0.0
    %856 = vmatprep.subr.mxu0 0.0
    %857 = vmatpush1.msra.mxu0 0.0
    %858 = vmatprep.subr.mxu0 0.0
    %859 = vmatpush1.msra.mxu0 0.0
    %860 = vmatprep.subr.mxu0 0.0
    %861 = vmatpush1.msra.mxu0 0.0
    %862 = vmatprep.subr.mxu0 0.0
    %863 = vmatpush1.msra.mxu0 0.0
    %864 = vmatprep.subr.mxu0 0.0
    %865 = vmatpush1.msra.mxu0 0.0
    %866 = vmatprep.subr.mxu0 0.0
    %867 = vmatpush1.msra.mxu0 0.0
    %868 = vmatprep.subr.mxu0 0.0
    %869 = vmatpush1.msra.mxu0 0.0
    %870 = vmatprep.subr.mxu0 0.0
    %871 = vmatpush1.msra.mxu0 0.0
    %872 = vmatprep.subr.mxu0 0.0
    %873 = vmatpush1.msra.mxu0 0.0
    %874 = vmatprep.subr.mxu0 0.0
    %875 = vmatpush1.msra.mxu0 0.0
    %876 = vmatprep.subr.mxu0 0.0
    %877 = vmatpush1.msra.mxu0 0.0
    %878 = vmatprep.subr.mxu0 0.0
    %879 = vmatpush1.msra.mxu0 0.0
    %880 = vmatprep.subr.mxu0 0.0
    %881 = vmatpush1.msra.mxu0 0.0
    %882 = vmatprep.subr.mxu0 0.0
    %883 = vmatpush1.msra.mxu0 0.0
    %884 = vmatprep.subr.mxu0 0.0
    %885 = vmatpush1.msra.mxu0 0.0
    %886 = vmatprep.subr.mxu0 0.0
    %887 = vmatpush1.msra.mxu0 0.0
    %888 = vmatprep.subr.mxu0 0.0
    %889 = vmatpush1.msra.mxu0 0.0
    %890 = vmatprep.subr.mxu0 0.0
    %891 = vmatpush1.msra.mxu0 0.0
    %892 = vmatprep.subr.mxu0 0.0
    %893 = vmatpush1.msra.mxu0 0.0
    %894 = vmatprep.subr.mxu0 0.0
    %895 = vmatpush1.msra.mxu0 0.0
    %896 = vmatprep.subr.mxu0 0.0
    %897 = vmatpush1.msra.mxu0 0.0
    %898 = vmatprep.subr.mxu0 0.0
    %899 = vmatpush1.msra.mxu0 0.0
    %900 = vmatprep.mubr.f32.mxu0 0.0
    %901 = vmatmul.mubr.f32.gmra.mrb[0].mxu0 %v834
    %v902 = vpop.f32.mrb[0].mxu0
    %v903 = vadd.f32 %v80, %v902
    %v904 = vpop.f32.mrb[0].mxu0
    %905 = vdwg.mxu0
    %v906 = vxor.u32 %v903, 2147483648
    %v907 = vmul.f32 %v906, 1.442695
    %v908 = vpow.pop %v907
    %v909 = vadd.f32 %v908, 1.0
    %v910 = vrcp.pop %v909
    %v911 = vmul.f32 1.0, %v910
    %v912 = vtanh.pop %v903
    %v913 = vmul.f32 %v911, %v711
    %915 = vrot.lane.b32.xlu0 %v912, 64
    %v916 = vpop.permute.xlu0 %915
    %v918 = vmul.f32 %v911, %v916
    %920 = vrot.lane.b32.xlu0 %v918, 32
    %v921 = vpop.permute.xlu0 %920
    %v923 = vadd.f32 %v913, %v921
    %v924 = vtanh.pop %v923
    %926 = vrot.lane.b32.xlu0 %v924, 64
    %v927 = vpop.permute.xlu0 %926
    %v929 = vmul.f32 %v911, %v927
    %vm930 = vcmask 1045509
    %v931 = vsel %vm930, %v86, %v82
    %v933 = vrot.slane %v823, 4
    %934 = vrot.lane.b32.xlu0 %v933, 40
    %v935 = vpop.permute.xlu0 %934
    %v937 = vsel %vm90, %v931, %v935
    %v939 = vrot.slane %v937, 4
    %v940 = vsel %vm92, %v939, 0
    %942 = vmatprep.subr.mxu0 0.0
    %943 = vmatpush1.msra.mxu0 %v55
    %944 = vmatprep.subr.mxu0 0.0
    %945 = vmatpush1.msra.mxu0 %v56
    %946 = vmatprep.subr.mxu0 0.0
    %947 = vmatpush1.msra.mxu0 %v57
    %948 = vmatprep.subr.mxu0 0.0
    %949 = vmatpush1.msra.mxu0 %v58
    %950 = vmatprep.subr.mxu0 0.0
    %951 = vmatpush1.msra.mxu0 %v59
    %952 = vmatprep.subr.mxu0 0.0
    %953 = vmatpush1.msra.mxu0 0.0
    %954 = vmatprep.subr.mxu0 0.0
    %955 = vmatpush1.msra.mxu0 0.0
    %956 = vmatprep.subr.mxu0 0.0
    %957 = vmatpush1.msra.mxu0 0.0
    %958 = vmatprep.subr.mxu0 0.0
    %959 = vmatpush1.msra.mxu0 0.0
    %960 = vmatprep.subr.mxu0 0.0
    %961 = vmatpush1.msra.mxu0 0.0
    %962 = vmatprep.subr.mxu0 0.0
    %963 = vmatpush1.msra.mxu0 0.0
    %964 = vmatprep.subr.mxu0 0.0
    %965 = vmatpush1.msra.mxu0 0.0
    %966 = vmatprep.subr.mxu0 0.0
    %967 = vmatpush1.msra.mxu0 0.0
    %968 = vmatprep.subr.mxu0 0.0
    %969 = vmatpush1.msra.mxu0 0.0
    %970 = vmatprep.subr.mxu0 0.0
    %971 = vmatpush1.msra.mxu0 0.0
    %972 = vmatprep.subr.mxu0 0.0
    %973 = vmatpush1.msra.mxu0 0.0
    %974 = vmatprep.subr.mxu0 0.0
    %975 = vmatpush1.msra.mxu0 0.0
    %976 = vmatprep.subr.mxu0 0.0
    %977 = vmatpush1.msra.mxu0 0.0
    %978 = vmatprep.subr.mxu0 0.0
    %979 = vmatpush1.msra.mxu0 0.0
    %980 = vmatprep.subr.mxu0 0.0
    %981 = vmatpush1.msra.mxu0 0.0
    %982 = vmatprep.subr.mxu0 0.0
    %983 = vmatpush1.msra.mxu0 0.0
    %984 = vmatprep.subr.mxu0 0.0
    %985 = vmatpush1.msra.mxu0 0.0
    %986 = vmatprep.subr.mxu0 0.0
    %987 = vmatpush1.msra.mxu0 0.0
    %988 = vmatprep.subr.mxu0 0.0
    %989 = vmatpush1.msra.mxu0 0.0
    %990 = vmatprep.subr.mxu0 0.0
    %991 = vmatpush1.msra.mxu0 0.0
    %992 = vmatprep.subr.mxu0 0.0
    %993 = vmatpush1.msra.mxu0 0.0
    %994 = vmatprep.subr.mxu0 0.0
    %995 = vmatpush1.msra.mxu0 0.0
    %996 = vmatprep.subr.mxu0 0.0
    %997 = vmatpush1.msra.mxu0 0.0
    %998 = vmatprep.subr.mxu0 0.0
    %999 = vmatpush1.msra.mxu0 0.0
    %1000 = vmatprep.subr.mxu0 0.0
    %1001 = vmatpush1.msra.mxu0 0.0
    %1002 = vmatprep.subr.mxu0 0.0
    %1003 = vmatpush1.msra.mxu0 0.0
    %1004 = vmatprep.subr.mxu0 0.0
    %1005 = vmatpush1.msra.mxu0 0.0
    %1006 = vmatprep.mubr.f32.mxu0 0.0
    %1007 = vmatmul.mubr.f32.gmra.mrb[0].mxu0 %v940
    %v1008 = vpop.f32.mrb[0].mxu0
    %v1009 = vadd.f32 %v73, %v1008
    %v1010 = vpop.f32.mrb[0].mxu0
    %1011 = vdwg.mxu0
    %v1012 = vxor.u32 %v1009, 2147483648
    %v1013 = vmul.f32 %v1012, 1.442695
    %v1014 = vpow.pop %v1013
    %v1015 = vadd.f32 %v1014, 1.0
    %v1016 = vrcp.pop %v1015
    %v1017 = vmul.f32 1.0, %v1016
    %v1018 = vtanh.pop %v1009
    %v1019 = vmul.f32 %v1017, %v817
    %1021 = vrot.lane.b32.xlu0 %v1018, 64
    %v1022 = vpop.permute.xlu0 %1021
    %v1024 = vmul.f32 %v1017, %v1022
    %1026 = vrot.lane.b32.xlu0 %v1024, 32
    %v1027 = vpop.permute.xlu0 %1026
    %v1029 = vadd.f32 %v1019, %v1027
    %v1030 = vtanh.pop %v1029
    %1032 = vrot.lane.b32.xlu0 %v1030, 64
    %v1033 = vpop.permute.xlu0 %1032
    %v1035 = vmul.f32 %v1017, %v1033
    %1037 = vrot.lane.b32.xlu0 %v1035, 32
    %v1038 = vpop.permute.xlu0 %1037
    %1041 = vrot.lane.b32.xlu0 %v929, 64
    %v1042 = vpop.permute.xlu0 %1041
    %v1044 = vsel %vm194, %v1038, %v1042
    %v1046 = vsel %vm196, %v1044, 0
    %1048 = vmatprep.subr.mxu0 0.0
    %1049 = vmatpush1.msra.mxu0 %v60
    %1050 = vmatprep.subr.mxu0 0.0
    %1051 = vmatpush1.msra.mxu0 %v61
    %1052 = vmatprep.subr.mxu0 0.0
    %1053 = vmatpush1.msra.mxu0 %v62
    %1054 = vmatprep.subr.mxu0 0.0
    %1055 = vmatpush1.msra.mxu0 %v63
    %1056 = vmatprep.subr.mxu0 0.0
    %1057 = vmatpush1.msra.mxu0 %v64
    %1058 = vmatprep.subr.mxu0 0.0
    %1059 = vmatpush1.msra.mxu0 %v65
    %1060 = vmatprep.subr.mxu0 0.0
    %1061 = vmatpush1.msra.mxu0 %v66
    %1062 = vmatprep.subr.mxu0 0.0
    %1063 = vmatpush1.msra.mxu0 %v67
    %1064 = vmatprep.subr.mxu0 0.0
    %1065 = vmatpush1.msra.mxu0 0.0
    %1066 = vmatprep.subr.mxu0 0.0
    %1067 = vmatpush1.msra.mxu0 0.0
    %1068 = vmatprep.subr.mxu0 0.0
    %1069 = vmatpush1.msra.mxu0 0.0
    %1070 = vmatprep.subr.mxu0 0.0
    %1071 = vmatpush1.msra.mxu0 0.0
    %1072 = vmatprep.subr.mxu0 0.0
    %1073 = vmatpush1.msra.mxu0 0.0
    %1074 = vmatprep.subr.mxu0 0.0
    %1075 = vmatpush1.msra.mxu0 0.0
    %1076 = vmatprep.subr.mxu0 0.0
    %1077 = vmatpush1.msra.mxu0 0.0
    %1078 = vmatprep.subr.mxu0 0.0
    %1079 = vmatpush1.msra.mxu0 0.0
    %1080 = vmatprep.subr.mxu0 0.0
    %1081 = vmatpush1.msra.mxu0 0.0
    %1082 = vmatprep.subr.mxu0 0.0
    %1083 = vmatpush1.msra.mxu0 0.0
    %1084 = vmatprep.subr.mxu0 0.0
    %1085 = vmatpush1.msra.mxu0 0.0
    %1086 = vmatprep.subr.mxu0 0.0
    %1087 = vmatpush1.msra.mxu0 0.0
    %1088 = vmatprep.subr.mxu0 0.0
    %1089 = vmatpush1.msra.mxu0 0.0
    %1090 = vmatprep.subr.mxu0 0.0
    %1091 = vmatpush1.msra.mxu0 0.0
    %1092 = vmatprep.subr.mxu0 0.0
    %1093 = vmatpush1.msra.mxu0 0.0
    %1094 = vmatprep.subr.mxu0 0.0
    %1095 = vmatpush1.msra.mxu0 0.0
    %1096 = vmatprep.subr.mxu0 0.0
    %1097 = vmatpush1.msra.mxu0 0.0
    %1098 = vmatprep.subr.mxu0 0.0
    %1099 = vmatpush1.msra.mxu0 0.0
    %1100 = vmatprep.subr.mxu0 0.0
    %1101 = vmatpush1.msra.mxu0 0.0
    %1102 = vmatprep.subr.mxu0 0.0
    %1103 = vmatpush1.msra.mxu0 0.0
    %1104 = vmatprep.subr.mxu0 0.0
    %1105 = vmatpush1.msra.mxu0 0.0
    %1106 = vmatprep.subr.mxu0 0.0
    %1107 = vmatpush1.msra.mxu0 0.0
    %1108 = vmatprep.subr.mxu0 0.0
    %1109 = vmatpush1.msra.mxu0 0.0
    %1110 = vmatprep.subr.mxu0 0.0
    %1111 = vmatpush1.msra.mxu0 0.0
    %1112 = vmatprep.mubr.f32.mxu0 0.0
    %1113 = vmatmul.mubr.f32.gmra.mrb[0].mxu0 %v1046
    %v1114 = vpop.f32.mrb[0].mxu0
    %v1115 = vadd.f32 %v80, %v1114
    %v1116 = vpop.f32.mrb[0].mxu0
    %1117 = vdwg.mxu0
    %v1118 = vxor.u32 %v1115, 2147483648
    %v1119 = vmul.f32 %v1118, 1.442695
    %v1120 = vpow.pop %v1119
    %v1121 = vadd.f32 %v1120, 1.0
    %v1122 = vrcp.pop %v1121
    %v1123 = vmul.f32 1.0, %v1122
    %v1124 = vtanh.pop %v1115
    %v1125 = vmul.f32 %v1123, %v923
    %1127 = vrot.lane.b32.xlu0 %v1124, 64
    %v1128 = vpop.permute.xlu0 %1127
    %v1130 = vmul.f32 %v1123, %v1128
    %1132 = vrot.lane.b32.xlu0 %v1130, 32
    %v1133 = vpop.permute.xlu0 %1132
    %v1135 = vadd.f32 %v1125, %v1133
    %v1136 = vtanh.pop %v1135
    %1138 = vrot.lane.b32.xlu0 %v1136, 64
    %v1139 = vpop.permute.xlu0 %1138
    %v1141 = vmul.f32 %v1123, %v1139
    %vm1142 = vcmask 1046534
    %v1143 = vsel %vm1142, %v86, %v82
    %v1145 = vrot.slane %v1035, 3
    %1146 = vrot.lane.b32.xlu0 %v1145, 40
    %v1147 = vpop.permute.xlu0 %1146
    %v1149 = vsel %vm90, %v1143, %v1147
    %v1151 = vrot.slane %v1149, 5
    %v1152 = vsel %vm92, %v1151, 0
    %1154 = vmatprep.subr.mxu0 0.0
    %1155 = vmatpush1.msra.mxu0 %v55
    %1156 = vmatprep.subr.mxu0 0.0
    %1157 = vmatpush1.msra.mxu0 %v56
    %1158 = vmatprep.subr.mxu0 0.0
    %1159 = vmatpush1.msra.mxu0 %v57
    %1160 = vmatprep.subr.mxu0 0.0
    %1161 = vmatpush1.msra.mxu0 %v58
    %1162 = vmatprep.subr.mxu0 0.0
    %1163 = vmatpush1.msra.mxu0 %v59
    %1164 = vmatprep.subr.mxu0 0.0
    %1165 = vmatpush1.msra.mxu0 0.0
    %1166 = vmatprep.subr.mxu0 0.0
    %1167 = vmatpush1.msra.mxu0 0.0
    %1168 = vmatprep.subr.mxu0 0.0
    %1169 = vmatpush1.msra.mxu0 0.0
    %1170 = vmatprep.subr.mxu0 0.0
    %1171 = vmatpush1.msra.mxu0 0.0
    %1172 = vmatprep.subr.mxu0 0.0
    %1173 = vmatpush1.msra.mxu0 0.0
    %1174 = vmatprep.subr.mxu0 0.0
    %1175 = vmatpush1.msra.mxu0 0.0
    %1176 = vmatprep.subr.mxu0 0.0
    %1177 = vmatpush1.msra.mxu0 0.0
    %1178 = vmatprep.subr.mxu0 0.0
    %1179 = vmatpush1.msra.mxu0 0.0
    %1180 = vmatprep.subr.mxu0 0.0
    %1181 = vmatpush1.msra.mxu0 0.0
    %1182 = vmatprep.subr.mxu0 0.0
    %1183 = vmatpush1.msra.mxu0 0.0
    %1184 = vmatprep.subr.mxu0 0.0
    %1185 = vmatpush1.msra.mxu0 0.0
    %1186 = vmatprep.subr.mxu0 0.0
    %1187 = vmatpush1.msra.mxu0 0.0
    %1188 = vmatprep.subr.mxu0 0.0
    %1189 = vmatpush1.msra.mxu0 0.0
    %1190 = vmatprep.subr.mxu0 0.0
    %1191 = vmatpush1.msra.mxu0 0.0
    %1192 = vmatprep.subr.mxu0 0.0
    %1193 = vmatpush1.msra.mxu0 0.0
    %1194 = vmatprep.subr.mxu0 0.0
    %1195 = vmatpush1.msra.mxu0 0.0
    %1196 = vmatprep.subr.mxu0 0.0
    %1197 = vmatpush1.msra.mxu0 0.0
    %1198 = vmatprep.subr.mxu0 0.0
    %1199 = vmatpush1.msra.mxu0 0.0
    %1200 = vmatprep.subr.mxu0 0.0
    %1201 = vmatpush1.msra.mxu0 0.0
    %1202 = vmatprep.subr.mxu0 0.0
    %1203 = vmatpush1.msra.mxu0 0.0
    %1204 = vmatprep.subr.mxu0 0.0
    %1205 = vmatpush1.msra.mxu0 0.0
    %1206 = vmatprep.subr.mxu0 0.0
    %1207 = vmatpush1.msra.mxu0 0.0
    %1208 = vmatprep.subr.mxu0 0.0
    %1209 = vmatpush1.msra.mxu0 0.0
    %1210 = vmatprep.subr.mxu0 0.0
    %1211 = vmatpush1.msra.mxu0 0.0
    %1212 = vmatprep.subr.mxu0 0.0
    %1213 = vmatpush1.msra.mxu0 0.0
    %1214 = vmatprep.subr.mxu0 0.0
    %1215 = vmatpush1.msra.mxu0 0.0
    %1216 = vmatprep.subr.mxu0 0.0
    %1217 = vmatpush1.msra.mxu0 0.0
    %1218 = vmatprep.mubr.f32.mxu0 0.0
    %1219 = vmatmul.mubr.f32.gmra.mrb[0].mxu0 %v1152
    %v1220 = vpop.f32.mrb[0].mxu0
    %v1221 = vadd.f32 %v73, %v1220
    %v1222 = vpop.f32.mrb[0].mxu0
    %1223 = vdwg.mxu0
    %v1224 = vxor.u32 %v1221, 2147483648
    %v1225 = vmul.f32 %v1224, 1.442695
    %v1226 = vpow.pop %v1225
    %v1227 = vadd.f32 %v1226, 1.0
    %v1228 = vrcp.pop %v1227
    %v1229 = vmul.f32 1.0, %v1228
    %v1230 = vtanh.pop %v1221
    %v1231 = vmul.f32 %v1229, %v1029
    %1233 = vrot.lane.b32.xlu0 %v1230, 64
    %v1234 = vpop.permute.xlu0 %1233
    %v1236 = vmul.f32 %v1229, %v1234
    %1238 = vrot.lane.b32.xlu0 %v1236, 32
    %v1239 = vpop.permute.xlu0 %1238
    %v1241 = vadd.f32 %v1231, %v1239
    %v1242 = vtanh.pop %v1241
    %1244 = vrot.lane.b32.xlu0 %v1242, 64
    %v1245 = vpop.permute.xlu0 %1244
    %v1247 = vmul.f32 %v1229, %v1245
    %1249 = vrot.lane.b32.xlu0 %v1247, 32
    %v1250 = vpop.permute.xlu0 %1249
    %1253 = vrot.lane.b32.xlu0 %v1141, 64
    %v1254 = vpop.permute.xlu0 %1253
    %v1256 = vsel %vm194, %v1250, %v1254
    %v1258 = vsel %vm196, %v1256, 0
    %1260 = vmatprep.subr.mxu0 0.0
    %1261 = vmatpush1.msra.mxu0 %v60
    %1262 = vmatprep.subr.mxu0 0.0
    %1263 = vmatpush1.msra.mxu0 %v61
    %1264 = vmatprep.subr.mxu0 0.0
    %1265 = vmatpush1.msra.mxu0 %v62
    %1266 = vmatprep.subr.mxu0 0.0
    %1267 = vmatpush1.msra.mxu0 %v63
    %1268 = vmatprep.subr.mxu0 0.0
    %1269 = vmatpush1.msra.mxu0 %v64
    %1270 = vmatprep.subr.mxu0 0.0
    %1271 = vmatpush1.msra.mxu0 %v65
    %1272 = vmatprep.subr.mxu0 0.0
    %1273 = vmatpush1.msra.mxu0 %v66
    %1274 = vmatprep.subr.mxu0 0.0
    %1275 = vmatpush1.msra.mxu0 %v67
    %1276 = vmatprep.subr.mxu0 0.0
    %1277 = vmatpush1.msra.mxu0 0.0
    %1278 = vmatprep.subr.mxu0 0.0
    %1279 = vmatpush1.msra.mxu0 0.0
    %1280 = vmatprep.subr.mxu0 0.0
    %1281 = vmatpush1.msra.mxu0 0.0
    %1282 = vmatprep.subr.mxu0 0.0
    %1283 = vmatpush1.msra.mxu0 0.0
    %1284 = vmatprep.subr.mxu0 0.0
    %1285 = vmatpush1.msra.mxu0 0.0
    %1286 = vmatprep.subr.mxu0 0.0
    %1287 = vmatpush1.msra.mxu0 0.0
    %1288 = vmatprep.subr.mxu0 0.0
    %1289 = vmatpush1.msra.mxu0 0.0
    %1290 = vmatprep.subr.mxu0 0.0
    %1291 = vmatpush1.msra.mxu0 0.0
    %1292 = vmatprep.subr.mxu0 0.0
    %1293 = vmatpush1.msra.mxu0 0.0
    %1294 = vmatprep.subr.mxu0 0.0
    %1295 = vmatpush1.msra.mxu0 0.0
    %1296 = vmatprep.subr.mxu0 0.0
    %1297 = vmatpush1.msra.mxu0 0.0
    %1298 = vmatprep.subr.mxu0 0.0
    %1299 = vmatpush1.msra.mxu0 0.0
    %1300 = vmatprep.subr.mxu0 0.0
    %1301 = vmatpush1.msra.mxu0 0.0
    %1302 = vmatprep.subr.mxu0 0.0
    %1303 = vmatpush1.msra.mxu0 0.0
    %1304 = vmatprep.subr.mxu0 0.0
    %1305 = vmatpush1.msra.mxu0 0.0
    %1306 = vmatprep.subr.mxu0 0.0
    %1307 = vmatpush1.msra.mxu0 0.0
    %1308 = vmatprep.subr.mxu0 0.0
    %1309 = vmatpush1.msra.mxu0 0.0
    %1310 = vmatprep.subr.mxu0 0.0
    %1311 = vmatpush1.msra.mxu0 0.0
    %1312 = vmatprep.subr.mxu0 0.0
    %1313 = vmatpush1.msra.mxu0 0.0
    %1314 = vmatprep.subr.mxu0 0.0
    %1315 = vmatpush1.msra.mxu0 0.0
    %1316 = vmatprep.subr.mxu0 0.0
    %1317 = vmatpush1.msra.mxu0 0.0
    %1318 = vmatprep.subr.mxu0 0.0
    %1319 = vmatpush1.msra.mxu0 0.0
    %1320 = vmatprep.subr.mxu0 0.0
    %1321 = vmatpush1.msra.mxu0 0.0
    %1322 = vmatprep.subr.mxu0 0.0
    %1323 = vmatpush1.msra.mxu0 0.0
    %1324 = vmatprep.mubr.f32.mxu0 0.0
    %1325 = vmatmul.mubr.f32.gmra.mrb[0].mxu0 %v1258
    %v1326 = vpop.f32.mrb[0].mxu0
    %v1327 = vadd.f32 %v80, %v1326
    %v1328 = vpop.f32.mrb[0].mxu0
    %1329 = vdwg.mxu0
    %v1330 = vxor.u32 %v1327, 2147483648
    %v1331 = vmul.f32 %v1330, 1.442695
    %v1332 = vpow.pop %v1331
    %v1333 = vadd.f32 %v1332, 1.0
    %v1334 = vrcp.pop %v1333
    %v1335 = vmul.f32 1.0, %v1334
    %v1336 = vtanh.pop %v1327
    %v1337 = vmul.f32 %v1335, %v1135
    %1339 = vrot.lane.b32.xlu0 %v1336, 64
    %v1340 = vpop.permute.xlu0 %1339
    %v1342 = vmul.f32 %v1335, %v1340
    %1344 = vrot.lane.b32.xlu0 %v1342, 32
    %v1345 = vpop.permute.xlu0 %1344
    %v1347 = vadd.f32 %v1337, %v1345
    %v1348 = vtanh.pop %v1347
    %1350 = vrot.lane.b32.xlu0 %v1348, 64
    %v1351 = vpop.permute.xlu0 %1350
    %v1353 = vmul.f32 %v1335, %v1351
    %vm1354 = vcmask 1047559
    %v1355 = vsel %vm1354, %v86, %v82
    %v1357 = vrot.slane %v1247, 2
    %1358 = vrot.lane.b32.xlu0 %v1357, 40
    %v1359 = vpop.permute.xlu0 %1358
    %v1361 = vsel %vm90, %v1355, %v1359
    %v1363 = vrot.slane %v1361, 6
    %v1364 = vsel %vm92, %v1363, 0
    %1366 = vmatprep.subr.mxu0 0.0
    %1367 = vmatpush1.msra.mxu0 %v55
    %1368 = vmatprep.subr.mxu0 0.0
    %1369 = vmatpush1.msra.mxu0 %v56
    %1370 = vmatprep.subr.mxu0 0.0
    %1371 = vmatpush1.msra.mxu0 %v57
    %1372 = vmatprep.subr.mxu0 0.0
    %1373 = vmatpush1.msra.mxu0 %v58
    %1374 = vmatprep.subr.mxu0 0.0
    %1375 = vmatpush1.msra.mxu0 %v59
    %1376 = vmatprep.subr.mxu0 0.0
    %1377 = vmatpush1.msra.mxu0 0.0
    %1378 = vmatprep.subr.mxu0 0.0
    %1379 = vmatpush1.msra.mxu0 0.0
    %1380 = vmatprep.subr.mxu0 0.0
    %1381 = vmatpush1.msra.mxu0 0.0
    %1382 = vmatprep.subr.mxu0 0.0
    %1383 = vmatpush1.msra.mxu0 0.0
    %1384 = vmatprep.subr.mxu0 0.0
    %1385 = vmatpush1.msra.mxu0 0.0
    %1386 = vmatprep.subr.mxu0 0.0
    %1387 = vmatpush1.msra.mxu0 0.0
    %1388 = vmatprep.subr.mxu0 0.0
    %1389 = vmatpush1.msra.mxu0 0.0
    %1390 = vmatprep.subr.mxu0 0.0
    %1391 = vmatpush1.msra.mxu0 0.0
    %1392 = vmatprep.subr.mxu0 0.0
    %1393 = vmatpush1.msra.mxu0 0.0
    %1394 = vmatprep.subr.mxu0 0.0
    %1395 = vmatpush1.msra.mxu0 0.0
    %1396 = vmatprep.subr.mxu0 0.0
    %1397 = vmatpush1.msra.mxu0 0.0
    %1398 = vmatprep.subr.mxu0 0.0
    %1399 = vmatpush1.msra.mxu0 0.0
    %1400 = vmatprep.subr.mxu0 0.0
    %1401 = vmatpush1.msra.mxu0 0.0
    %1402 = vmatprep.subr.mxu0 0.0
    %1403 = vmatpush1.msra.mxu0 0.0
    %1404 = vmatprep.subr.mxu0 0.0
    %1405 = vmatpush1.msra.mxu0 0.0
    %1406 = vmatprep.subr.mxu0 0.0
    %1407 = vmatpush1.msra.mxu0 0.0
    %1408 = vmatprep.subr.mxu0 0.0
    %1409 = vmatpush1.msra.mxu0 0.0
    %1410 = vmatprep.subr.mxu0 0.0
    %1411 = vmatpush1.msra.mxu0 0.0
    %1412 = vmatprep.subr.mxu0 0.0
    %1413 = vmatpush1.msra.mxu0 0.0
    %1414 = vmatprep.subr.mxu0 0.0
    %1415 = vmatpush1.msra.mxu0 0.0
    %1416 = vmatprep.subr.mxu0 0.0
    %1417 = vmatpush1.msra.mxu0 0.0
    %1418 = vmatprep.subr.mxu0 0.0
    %1419 = vmatpush1.msra.mxu0 0.0
    %1420 = vmatprep.subr.mxu0 0.0
    %1421 = vmatpush1.msra.mxu0 0.0
    %1422 = vmatprep.subr.mxu0 0.0
    %1423 = vmatpush1.msra.mxu0 0.0
    %1424 = vmatprep.subr.mxu0 0.0
    %1425 = vmatpush1.msra.mxu0 0.0
    %1426 = vmatprep.subr.mxu0 0.0
    %1427 = vmatpush1.msra.mxu0 0.0
    %1428 = vmatprep.subr.mxu0 0.0
    %1429 = vmatpush1.msra.mxu0 0.0
    %1430 = vmatprep.mubr.f32.mxu0 0.0
    %1431 = vmatmul.mubr.f32.gmra.mrb[0].mxu0 %v1364
    %v1432 = vpop.f32.mrb[0].mxu0
    %v1433 = vadd.f32 %v73, %v1432
    %v1434 = vpop.f32.mrb[0].mxu0
    %1435 = vdwg.mxu0
    %v1436 = vxor.u32 %v1433, 2147483648
    %v1437 = vmul.f32 %v1436, 1.442695
    %v1438 = vpow.pop %v1437
    %v1439 = vadd.f32 %v1438, 1.0
    %v1440 = vrcp.pop %v1439
    %v1441 = vmul.f32 1.0, %v1440
    %v1442 = vtanh.pop %v1433
    %v1443 = vmul.f32 %v1441, %v1241
    %1445 = vrot.lane.b32.xlu0 %v1442, 64
    %v1446 = vpop.permute.xlu0 %1445
    %v1448 = vmul.f32 %v1441, %v1446
    %1450 = vrot.lane.b32.xlu0 %v1448, 32
    %v1451 = vpop.permute.xlu0 %1450
    %v1453 = vadd.f32 %v1443, %v1451
    %v1454 = vtanh.pop %v1453
    %1456 = vrot.lane.b32.xlu0 %v1454, 64
    %v1457 = vpop.permute.xlu0 %1456
    %v1459 = vmul.f32 %v1441, %v1457
    %1461 = vrot.lane.b32.xlu0 %v1459, 32
    %v1462 = vpop.permute.xlu0 %1461
    %1465 = vrot.lane.b32.xlu0 %v1353, 64
    %v1466 = vpop.permute.xlu0 %1465
    %v1468 = vsel %vm194, %v1462, %v1466
    %v1470 = vsel %vm196, %v1468, 0
    %1472 = vmatprep.subr.mxu0 0.0
    %1473 = vmatpush1.msra.mxu0 %v60
    %1474 = vmatprep.subr.mxu0 0.0
    %1475 = vmatpush1.msra.mxu0 %v61
    %1476 = vmatprep.subr.mxu0 0.0
    %1477 = vmatpush1.msra.mxu0 %v62
    %1478 = vmatprep.subr.mxu0 0.0
    %1479 = vmatpush1.msra.mxu0 %v63
    %1480 = vmatprep.subr.mxu0 0.0
    %1481 = vmatpush1.msra.mxu0 %v64
    %1482 = vmatprep.subr.mxu0 0.0
    %1483 = vmatpush1.msra.mxu0 %v65
    %1484 = vmatprep.subr.mxu0 0.0
    %1485 = vmatpush1.msra.mxu0 %v66
    %1486 = vmatprep.subr.mxu0 0.0
    %1487 = vmatpush1.msra.mxu0 %v67
    %1488 = vmatprep.subr.mxu0 0.0
    %1489 = vmatpush1.msra.mxu0 0.0
    %1490 = vmatprep.subr.mxu0 0.0
    %1491 = vmatpush1.msra.mxu0 0.0
    %1492 = vmatprep.subr.mxu0 0.0
    %1493 = vmatpush1.msra.mxu0 0.0
    %1494 = vmatprep.subr.mxu0 0.0
    %1495 = vmatpush1.msra.mxu0 0.0
    %1496 = vmatprep.subr.mxu0 0.0
    %1497 = vmatpush1.msra.mxu0 0.0
    %1498 = vmatprep.subr.mxu0 0.0
    %1499 = vmatpush1.msra.mxu0 0.0
    %1500 = vmatprep.subr.mxu0 0.0
    %1501 = vmatpush1.msra.mxu0 0.0
    %1502 = vmatprep.subr.mxu0 0.0
    %1503 = vmatpush1.msra.mxu0 0.0
    %1504 = vmatprep.subr.mxu0 0.0
    %1505 = vmatpush1.msra.mxu0 0.0
    %1506 = vmatprep.subr.mxu0 0.0
    %1507 = vmatpush1.msra.mxu0 0.0
    %1508 = vmatprep.subr.mxu0 0.0
    %1509 = vmatpush1.msra.mxu0 0.0
    %1510 = vmatprep.subr.mxu0 0.0
    %1511 = vmatpush1.msra.mxu0 0.0
    %1512 = vmatprep.subr.mxu0 0.0
    %1513 = vmatpush1.msra.mxu0 0.0
    %1514 = vmatprep.subr.mxu0 0.0
    %1515 = vmatpush1.msra.mxu0 0.0
    %1516 = vmatprep.subr.mxu0 0.0
    %1517 = vmatpush1.msra.mxu0 0.0
    %1518 = vmatprep.subr.mxu0 0.0
    %1519 = vmatpush1.msra.mxu0 0.0
    %1520 = vmatprep.subr.mxu0 0.0
    %1521 = vmatpush1.msra.mxu0 0.0
    %1522 = vmatprep.subr.mxu0 0.0
    %1523 = vmatpush1.msra.mxu0 0.0
    %1524 = vmatprep.subr.mxu0 0.0
    %1525 = vmatpush1.msra.mxu0 0.0
    %1526 = vmatprep.subr.mxu0 0.0
    %1527 = vmatpush1.msra.mxu0 0.0
    %1528 = vmatprep.subr.mxu0 0.0
    %1529 = vmatpush1.msra.mxu0 0.0
    %1530 = vmatprep.subr.mxu0 0.0
    %1531 = vmatpush1.msra.mxu0 0.0
    %1532 = vmatprep.subr.mxu0 0.0
    %1533 = vmatpush1.msra.mxu0 0.0
    %1534 = vmatprep.subr.mxu0 0.0
    %1535 = vmatpush1.msra.mxu0 0.0
    %1536 = vmatprep.mubr.f32.mxu0 0.0
    %1537 = vmatmul.mubr.f32.gmra.mrb[0].mxu0 %v1470
    %v1538 = vpop.f32.mrb[0].mxu0
    %v1539 = vadd.f32 %v80, %v1538
    %v1540 = vpop.f32.mrb[0].mxu0
    %1541 = vdwg.mxu0
    %v1542 = vxor.u32 %v1539, 2147483648
    %v1543 = vmul.f32 %v1542, 1.442695
    %v1544 = vpow.pop %v1543
    %v1545 = vadd.f32 %v1544, 1.0
    %v1546 = vrcp.pop %v1545
    %v1547 = vmul.f32 1.0, %v1546
    %v1548 = vtanh.pop %v1539
    %v1549 = vmul.f32 %v1547, %v1347
    %1551 = vrot.lane.b32.xlu0 %v1548, 64
    %v1552 = vpop.permute.xlu0 %1551
    %v1554 = vmul.f32 %v1547, %v1552
    %1556 = vrot.lane.b32.xlu0 %v1554, 32
    %v1557 = vpop.permute.xlu0 %1556
    %v1559 = vadd.f32 %v1549, %v1557
    %v1560 = vtanh.pop %v1559
    %1562 = vrot.lane.b32.xlu0 %v1560, 64
    %v1563 = vpop.permute.xlu0 %1562
    %v1565 = vmul.f32 %v1547, %v1563
    %v1568 = vrot.slane %v1459, 1
    %1569 = vrot.lane.b32.xlu0 %v1568, 40
    %v1570 = vpop.permute.xlu0 %1569
    %v1572 = vsel %vm90, %v82, %v1570
    %v1573 = vsel %vm90, %v86, %v1570
    %vm1576 = vcmask 1040384
    %v1577 = vrot.slane %v1572, 7
    %v1578 = vrot.slane %v1573, 7
    %v1579 = vsel %vm1576, %v1577, %v1578
    %v1580 = vsel %vm92, %v1579, 0
    %1582 = vmatprep.subr.mxu0 0.0
    %1583 = vmatpush1.msra.mxu0 %v55
    %1584 = vmatprep.subr.mxu0 0.0
    %1585 = vmatpush1.msra.mxu0 %v56
    %1586 = vmatprep.subr.mxu0 0.0
    %1587 = vmatpush1.msra.mxu0 %v57
    %1588 = vmatprep.subr.mxu0 0.0
    %1589 = vmatpush1.msra.mxu0 %v58
    %1590 = vmatprep.subr.mxu0 0.0
    %1591 = vmatpush1.msra.mxu0 %v59
    %1592 = vmatprep.subr.mxu0 0.0
    %1593 = vmatpush1.msra.mxu0 0.0
    %1594 = vmatprep.subr.mxu0 0.0
    %1595 = vmatpush1.msra.mxu0 0.0
    %1596 = vmatprep.subr.mxu0 0.0
    %1597 = vmatpush1.msra.mxu0 0.0
    %1598 = vmatprep.subr.mxu0 0.0
    %1599 = vmatpush1.msra.mxu0 0.0
    %1600 = vmatprep.subr.mxu0 0.0
    %1601 = vmatpush1.msra.mxu0 0.0
    %1602 = vmatprep.subr.mxu0 0.0
    %1603 = vmatpush1.msra.mxu0 0.0
    %1604 = vmatprep.subr.mxu0 0.0
    %1605 = vmatpush1.msra.mxu0 0.0
    %1606 = vmatprep.subr.mxu0 0.0
    %1607 = vmatpush1.msra.mxu0 0.0
    %1608 = vmatprep.subr.mxu0 0.0
    %1609 = vmatpush1.msra.mxu0 0.0
    %1610 = vmatprep.subr.mxu0 0.0
    %1611 = vmatpush1.msra.mxu0 0.0
    %1612 = vmatprep.subr.mxu0 0.0
    %1613 = vmatpush1.msra.mxu0 0.0
    %1614 = vmatprep.subr.mxu0 0.0
    %1615 = vmatpush1.msra.mxu0 0.0
    %1616 = vmatprep.subr.mxu0 0.0
    %1617 = vmatpush1.msra.mxu0 0.0
    %1618 = vmatprep.subr.mxu0 0.0
    %1619 = vmatpush1.msra.mxu0 0.0
    %1620 = vmatprep.subr.mxu0 0.0
    %1621 = vmatpush1.msra.mxu0 0.0
    %1622 = vmatprep.subr.mxu0 0.0
    %1623 = vmatpush1.msra.mxu0 0.0
    %1624 = vmatprep.subr.mxu0 0.0
    %1625 = vmatpush1.msra.mxu0 0.0
    %1626 = vmatprep.subr.mxu0 0.0
    %1627 = vmatpush1.msra.mxu0 0.0
    %1628 = vmatprep.subr.mxu0 0.0
    %1629 = vmatpush1.msra.mxu0 0.0
    %1630 = vmatprep.subr.mxu0 0.0
    %1631 = vmatpush1.msra.mxu0 0.0
    %1632 = vmatprep.subr.mxu0 0.0
    %1633 = vmatpush1.msra.mxu0 0.0
    %1634 = vmatprep.subr.mxu0 0.0
    %1635 = vmatpush1.msra.mxu0 0.0
    %1636 = vmatprep.subr.mxu0 0.0
    %1637 = vmatpush1.msra.mxu0 0.0
    %1638 = vmatprep.subr.mxu0 0.0
    %1639 = vmatpush1.msra.mxu0 0.0
    %1640 = vmatprep.subr.mxu0 0.0
    %1641 = vmatpush1.msra.mxu0 0.0
    %1642 = vmatprep.subr.mxu0 0.0
    %1643 = vmatpush1.msra.mxu0 0.0
    %1644 = vmatprep.subr.mxu0 0.0
    %1645 = vmatpush1.msra.mxu0 0.0
    %1646 = vmatprep.mubr.f32.mxu0 0.0
    %1647 = vmatmul.mubr.f32.gmra.mrb[0].mxu0 %v1580
    %v1648 = vpop.f32.mrb[0].mxu0
    %v1649 = vadd.f32 %v73, %v1648
    %v1650 = vpop.f32.mrb[0].mxu0
    %1651 = vdwg.mxu0
    %v1652 = vxor.u32 %v1649, 2147483648
    %v1653 = vmul.f32 %v1652, 1.442695
    %v1654 = vpow.pop %v1653
    %v1655 = vadd.f32 %v1654, 1.0
    %v1656 = vrcp.pop %v1655
    %v1657 = vmul.f32 1.0, %v1656
    %v1658 = vtanh.pop %v1649
    %v1659 = vmul.f32 %v1657, %v1453
    %1661 = vrot.lane.b32.xlu0 %v1658, 64
    %v1662 = vpop.permute.xlu0 %1661
    %v1664 = vmul.f32 %v1657, %v1662
    %1666 = vrot.lane.b32.xlu0 %v1664, 32
    %v1667 = vpop.permute.xlu0 %1666
    %v1669 = vadd.f32 %v1659, %v1667
    %v1670 = vtanh.pop %v1669
    %1672 = vrot.lane.b32.xlu0 %v1670, 64
    %v1673 = vpop.permute.xlu0 %1672
    %v1675 = vmul.f32 %v1657, %v1673
    %1677 = vrot.lane.b32.xlu0 %v1675, 32
    %v1678 = vpop.permute.xlu0 %1677
    %1681 = vrot.lane.b32.xlu0 %v1565, 64
    %v1682 = vpop.permute.xlu0 %1681
    %v1684 = vsel %vm194, %v1678, %v1682
    %v1686 = vsel %vm196, %v1684, 0
    %1688 = vmatprep.subr.mxu0 0.0
    %1689 = vmatpush1.msra.mxu0 %v60
    %1690 = vmatprep.subr.mxu0 0.0
    %1691 = vmatpush1.msra.mxu0 %v61
    %1692 = vmatprep.subr.mxu0 0.0
    %1693 = vmatpush1.msra.mxu0 %v62
    %1694 = vmatprep.subr.mxu0 0.0
    %1695 = vmatpush1.msra.mxu0 %v63
    %1696 = vmatprep.subr.mxu0 0.0
    %1697 = vmatpush1.msra.mxu0 %v64
    %1698 = vmatprep.subr.mxu0 0.0
    %1699 = vmatpush1.msra.mxu0 %v65
    %1700 = vmatprep.subr.mxu0 0.0
    %1701 = vmatpush1.msra.mxu0 %v66
    %1702 = vmatprep.subr.mxu0 0.0
    %1703 = vmatpush1.msra.mxu0 %v67
    %1704 = vmatprep.subr.mxu0 0.0
    %1705 = vmatpush1.msra.mxu0 0.0
    %1706 = vmatprep.subr.mxu0 0.0
    %1707 = vmatpush1.msra.mxu0 0.0
    %1708 = vmatprep.subr.mxu0 0.0
    %1709 = vmatpush1.msra.mxu0 0.0
    %1710 = vmatprep.subr.mxu0 0.0
    %1711 = vmatpush1.msra.mxu0 0.0
    %1712 = vmatprep.subr.mxu0 0.0
    %1713 = vmatpush1.msra.mxu0 0.0
    %1714 = vmatprep.subr.mxu0 0.0
    %1715 = vmatpush1.msra.mxu0 0.0
    %1716 = vmatprep.subr.mxu0 0.0
    %1717 = vmatpush1.msra.mxu0 0.0
    %1718 = vmatprep.subr.mxu0 0.0
    %1719 = vmatpush1.msra.mxu0 0.0
    %1720 = vmatprep.subr.mxu0 0.0
    %1721 = vmatpush1.msra.mxu0 0.0
    %1722 = vmatprep.subr.mxu0 0.0
    %1723 = vmatpush1.msra.mxu0 0.0
    %1724 = vmatprep.subr.mxu0 0.0
    %1725 = vmatpush1.msra.mxu0 0.0
    %1726 = vmatprep.subr.mxu0 0.0
    %1727 = vmatpush1.msra.mxu0 0.0
    %1728 = vmatprep.subr.mxu0 0.0
    %1729 = vmatpush1.msra.mxu0 0.0
    %1730 = vmatprep.subr.mxu0 0.0
    %1731 = vmatpush1.msra.mxu0 0.0
    %1732 = vmatprep.subr.mxu0 0.0
    %1733 = vmatpush1.msra.mxu0 0.0
    %1734 = vmatprep.subr.mxu0 0.0
    %1735 = vmatpush1.msra.mxu0 0.0
    %1736 = vmatprep.subr.mxu0 0.0
    %1737 = vmatpush1.msra.mxu0 0.0
    %1738 = vmatprep.subr.mxu0 0.0
    %1739 = vmatpush1.msra.mxu0 0.0
    %1740 = vmatprep.subr.mxu0 0.0
    %1741 = vmatpush1.msra.mxu0 0.0
    %1742 = vmatprep.subr.mxu0 0.0
    %1743 = vmatpush1.msra.mxu0 0.0
    %1744 = vmatprep.subr.mxu0 0.0
    %1745 = vmatpush1.msra.mxu0 0.0
    %1746 = vmatprep.subr.mxu0 0.0
    %1747 = vmatpush1.msra.mxu0 0.0
    %1748 = vmatprep.subr.mxu0 0.0
    %1749 = vmatpush1.msra.mxu0 0.0
    %1750 = vmatprep.subr.mxu0 0.0
    %1751 = vmatpush1.msra.mxu0 0.0
    %1752 = vmatprep.mubr.f32.mxu0 0.0
    %1753 = vmatmul.mubr.f32.gmra.mrb[0].mxu0 %v1686
    %v1754 = vpop.f32.mrb[0].mxu0
    %v1755 = vadd.f32 %v80, %v1754
    %v1756 = vpop.f32.mrb[0].mxu0
    %1757 = vdwg.mxu0
    %v1758 = vxor.u32 %v1755, 2147483648
    %v1759 = vmul.f32 %v1758, 1.442695
    %v1760 = vpow.pop %v1759
    %v1761 = vadd.f32 %v1760, 1.0
    %v1762 = vrcp.pop %v1761
    %v1763 = vmul.f32 1.0, %v1762
    %v1764 = vtanh.pop %v1755
    %v1765 = vmul.f32 %v1763, %v1559
    %1767 = vrot.lane.b32.xlu0 %v1764, 64
    %v1768 = vpop.permute.xlu0 %1767
    %v1770 = vmul.f32 %v1763, %v1768
    %1772 = vrot.lane.b32.xlu0 %v1770, 32
    %v1773 = vpop.permute.xlu0 %1772
    %v1775 = vadd.f32 %v1765, %v1773
    %v1776 = vtanh.pop %v1775
    %1778 = vrot.lane.b32.xlu0 %v1776, 64
    %v1779 = vpop.permute.xlu0 %1778
    %v1781 = vmul.f32 %v1763, %v1779
    %v1782 = vld [vmem:[%s5] sm:$0xff]
    %v1783 = vld [vmem:[%s5 + $0x8] sm:$0xff]
    %v1784 = vld [vmem:[%s5 + $0x10] sm:$0xff]
    %v1785 = vld [vmem:[%s5 + $0x18] sm:$0xff]
    %v1786 = vld [vmem:[%s6] sm:$0x1]
    %v1788 = vlaneseq
    %v1789 = vshrl.u32 %v1788, 7
    %v1790 = vsub.s32 0, %v1789
    %v1791 = vrot.slane %v1786, %v1790
    %1794 = vrot.lane.b32.xlu0 %v1781, 32
    %v1795 = vpop.permute.xlu0 %1794
    %v1796 = vsel %vm194, %v1795, 0
    %1798 = vmatprep.subr.mxu0 0.0
    %1799 = vmatpush1.msra.mxu0 %v1782
    %1800 = vmatprep.subr.mxu0 0.0
    %1801 = vmatpush1.msra.mxu0 %v1783
    %1802 = vmatprep.subr.mxu0 0.0
    %1803 = vmatpush1.msra.mxu0 %v1784
    %1804 = vmatprep.subr.mxu0 0.0
    %1805 = vmatpush1.msra.mxu0 %v1785
    %1806 = vmatprep.subr.mxu0 0.0
    %1807 = vmatpush1.msra.mxu0 0.0
    %1808 = vmatprep.subr.mxu0 0.0
    %1809 = vmatpush1.msra.mxu0 0.0
    %1810 = vmatprep.subr.mxu0 0.0
    %1811 = vmatpush1.msra.mxu0 0.0
    %1812 = vmatprep.subr.mxu0 0.0
    %1813 = vmatpush1.msra.mxu0 0.0
    %1814 = vmatprep.subr.mxu0 0.0
    %1815 = vmatpush1.msra.mxu0 0.0
    %1816 = vmatprep.subr.mxu0 0.0
    %1817 = vmatpush1.msra.mxu0 0.0
    %1818 = vmatprep.subr.mxu0 0.0
    %1819 = vmatpush1.msra.mxu0 0.0
    %1820 = vmatprep.subr.mxu0 0.0
    %1821 = vmatpush1.msra.mxu0 0.0
    %1822 = vmatprep.subr.mxu0 0.0
    %1823 = vmatpush1.msra.mxu0 0.0
    %1824 = vmatprep.subr.mxu0 0.0
    %1825 = vmatpush1.msra.mxu0 0.0
    %1826 = vmatprep.subr.mxu0 0.0
    %1827 = vmatpush1.msra.mxu0 0.0
    %1828 = vmatprep.subr.mxu0 0.0
    %1829 = vmatpush1.msra.mxu0 0.0
    %1830 = vmatprep.subr.mxu0 0.0
    %1831 = vmatpush1.msra.mxu0 0.0
    %1832 = vmatprep.subr.mxu0 0.0
    %1833 = vmatpush1.msra.mxu0 0.0
    %1834 = vmatprep.subr.mxu0 0.0
    %1835 = vmatpush1.msra.mxu0 0.0
    %1836 = vmatprep.subr.mxu0 0.0
    %1837 = vmatpush1.msra.mxu0 0.0
    %1838 = vmatprep.subr.mxu0 0.0
    %1839 = vmatpush1.msra.mxu0 0.0
    %1840 = vmatprep.subr.mxu0 0.0
    %1841 = vmatpush1.msra.mxu0 0.0
    %1842 = vmatprep.subr.mxu0 0.0
    %1843 = vmatpush1.msra.mxu0 0.0
    %1844 = vmatprep.subr.mxu0 0.0
    %1845 = vmatpush1.msra.mxu0 0.0
    %1846 = vmatprep.subr.mxu0 0.0
    %1847 = vmatpush1.msra.mxu0 0.0
    %1848 = vmatprep.subr.mxu0 0.0
    %1849 = vmatpush1.msra.mxu0 0.0
    %1850 = vmatprep.subr.mxu0 0.0
    %1851 = vmatpush1.msra.mxu0 0.0
    %1852 = vmatprep.subr.mxu0 0.0
    %1853 = vmatpush1.msra.mxu0 0.0
    %1854 = vmatprep.subr.mxu0 0.0
    %1855 = vmatpush1.msra.mxu0 0.0
    %1856 = vmatprep.subr.mxu0 0.0
    %1857 = vmatpush1.msra.mxu0 0.0
    %1858 = vmatprep.subr.mxu0 0.0
    %1859 = vmatpush1.msra.mxu0 0.0
    %1860 = vmatprep.subr.mxu0 0.0
    %1861 = vmatpush1.msra.mxu0 0.0
    %1862 = vmatprep.mubr.f32.mxu0 0.0
    %1863 = vmatmul.mubr.f32.gmra.mrb[0].mxu0 %v1796
    %v1864 = vpop.f32.mrb[0].mxu0
    %v1865 = vadd.f32 %v1791, %v1864
    %v1866 = vpop.f32.mrb[0].mxu0
    %1867 = vdwg.mxu0
    %vm1868 = vcmask 33792
    %1869 = vst.msk [vmem:[#allocation7] sm:$0x3] %vm1868, %v1865
    // Predicated region
    $region38: #{tpu_custom_call.1} parent=1 // pred_check
      _
    $region39: #{tpu_custom_call.1} parent=1 // pred_check_branch
      %1871 = sbr.rel (0) target = $region41
    $region40: #{tpu_custom_call.1} parent=1 // pred_region
      %s1873 = ssub.s32 32, 32
      %1874 = vsyncadd [#allocation4], %s1873
      %s1876 = sshll.u32 [#allocation7], 4
      %s1877 = int_to_ptr.vmem [resolvable:$true] %s1876
      %1879 = dma.vmem_to_hbm [thread:$0]  %s1877, 32, %s7, [#allocation4]
    $region41: #{tpu_custom_call.1} parent=1 // pred_fallthru
      _
    // Predicated region
    $region42: #{tpu_custom_call.1} parent=1 // pred_check
      _
    $region43: #{tpu_custom_call.1} parent=1 // pred_check_branch
      %1881 = sbr.rel (0) target = $region45
    $region44: #{tpu_custom_call.1} parent=1 // pred_region
      %1882 = dma.done [#allocation4], 32
    $region45: #{tpu_custom_call.1} parent=1 // pred_fallthru
      _
    %1883 = vsyncpa [#allocation3], 1
    %1884 = vsyncpa [#allocation6], 1
    %1885 = vsyncpa [#allocation4], 1

</llo_original>
